<compile_context>
chip_gen: v5e
topology: v5e:2x2
jax: 0.10.0
libtpu: 0.0.40
codegen_flags: <defaults>
</compile_context>

<pallas_src>
import functools

import jax
import jax.numpy as jnp
from jax.experimental import pallas as pl
from jax.experimental.pallas import tpu as pltpu

EPS = 1e-5
_VMEM_LIMIT_BYTES = 32 * 1024 * 1024   # safe on v5e/v6e/v7x; >> tile footprint


# ----------------------------------------------------------------------------
# wrapper-side layout helpers
# ----------------------------------------------------------------------------
def _pick_strip_height(H, requested=None, max_rows=512):
    """Strip height that divides H and is a multiple of 8 (sublane rule)."""
    if requested is not None:
        if H % requested or (requested % 8 and requested != H):
            raise ValueError("strip_rows must divide H and be a multiple of 8")
        return requested
    if H % 8:
        return H                               # single strip per image
    best = 8
    for th in range(8, min(H, max_rows) + 1, 8):
        if H % th == 0:
            best = th
    return best


def _gather_strips(xp, th):
    """xp: (N, H+2, L) padded+lane-folded -> (N, nH, th+2, L) halo strips."""
    n, hp, _ = xp.shape
    n_h = (hp - 2) // th
    return jnp.stack([xp[:, i * th:i * th + th + 2, :] for i in range(n_h)],
                     axis=1)


def _toeplitz_band(w, W):
    """HWIO (3,3,Cin,Cout) -> (3, (W+2)*Cin, W*Cout) banded matmul weights.

    Row `dy` of the padded strip (lane-folded over width x channel) times
    band[dy] gives that row's contribution to a full output row (W*Cout).
    """
    kh, kw, cin, cout = w.shape
    wp = W + 2
    # sel[d, c, p] == 1  iff padded column p feeds output column c via tap d
    sel = (jnp.arange(wp)[None, None, :] ==
           (jnp.arange(W)[None, :, None] + jnp.arange(kw)[:, None, None]))
    band = jnp.einsum("dcp,kdio->kpico", sel.astype(w.dtype), w)
    return band.reshape(kh, wp * cin, W * cout)


def _bn_affine(stats, gamma, beta, count, cout):
    """Reduce per-strip (sum, sumsq) partials -> per-channel scale/shift."""
    s = stats.reshape(-1, 2, stats.shape[-1] // cout, cout).sum(axis=(0, 2))
    mean = s[0] / count
    var = s[1] / count - mean * mean           # biased, matches torch training
    scale = gamma * jax.lax.rsqrt(var + EPS)
    shift = beta - mean * scale
    return scale, shift


# ----------------------------------------------------------------------------
# kernels
# ----------------------------------------------------------------------------
def _conv_strip(strip, band_ref):
    """strip: (TH+2, L) f32; band_ref: (3, L, W*Cout).  Returns (TH, W*Cout)."""
    th = strip.shape[0] - 2
    dt = band_ref.dtype                        # f32 or bf16 (MXU operand dtype)
    acc = jnp.dot(strip[0:th].astype(dt), band_ref[0],
                  preferred_element_type=jnp.float32)
    for k in (1, 2):
        acc = acc + jnp.dot(strip[k:k + th].astype(dt), band_ref[k],
                            preferred_element_type=jnp.float32)
    return acc


def _conv1_kernel(xs_ref, band_ref, bias_ref, y_ref, st_ref):
    """conv1 (+bias) on one halo strip + BN1 partial stats."""
    strip = xs_ref[0, 0]                                   # (TH+2, Wp*Cin)
    acc = _conv_strip(strip, band_ref) + bias_ref[...]     # (TH, W*Cout) f32
    y_ref[0] = acc
    st_ref[0, 0] = jnp.concatenate(
        [jnp.sum(acc, axis=0, keepdims=True),
         jnp.sum(acc * acc, axis=0, keepdims=True)], axis=0)


def _bn_relu_conv2_kernel(xs_ref, band_ref, bias_ref, scale_ref, shift_ref,
                          y_ref, st_ref, *, W, Cout):
    """BN1 + ReLU (fused) -> conv2 (+bias) on one halo strip + BN2 stats."""
    i = pl.program_id(1)
    n_h = pl.num_programs(1)
    th = xs_ref.shape[2] - 2
    wpc = xs_ref.shape[3]

    z = jnp.maximum(xs_ref[0, 0] * scale_ref[...] + shift_ref[...], 0.0)

    # Zero-padding is defined on the *post*-BN/ReLU tensor, so re-zero the
    # pad columns and (at image top/bottom strips) the pad halo rows.
    lane = jax.lax.broadcasted_iota(jnp.int32, (1, wpc), 1)
    col_ok = (lane >= Cout) & (lane < (W + 1) * Cout)
    row = jax.lax.broadcasted_iota(jnp.int32, (th + 2, 1), 0)
    row_pad = ((row == 0) & (i == 0)) | ((row == th + 1) & (i == n_h - 1))
    z = jnp.where(col_ok & jnp.logical_not(row_pad), z, 0.0)

    acc = _conv_strip(z, band_ref) + bias_ref[...]
    y_ref[0] = acc
    st_ref[0, 0] = jnp.concatenate(
        [jnp.sum(acc, axis=0, keepdims=True),
         jnp.sum(acc * acc, axis=0, keepdims=True)], axis=0)


def _bn2_kernel(x_ref, scale_ref, shift_ref, o_ref):
    """Final BN2 normalization (no ReLU), lane-dense elementwise affine."""
    o_ref[0] = x_ref[0] * scale_ref[...] + shift_ref[...]


# ----------------------------------------------------------------------------
# public wrapper
# ----------------------------------------------------------------------------
@functools.partial(jax.jit, static_argnames=("strip_rows", "mxu_dtype"))
def double_conv(x_nchw, params, *, strip_rows=None, mxu_dtype=jnp.float32):
    """x_nchw: (N, Cin, H, W) f32 -> (N, Cout, H, W) f32."""
    w1, b1, g1, be1, w2, b2, g2, be2 = params
    N, Cin, H, W = x_nchw.shape
    Cout = w1.shape[-1]
    Wp = W + 2
    WC = W * Cout

    TH = _pick_strip_height(H, strip_rows)
    nH = H // TH

    cparams = pltpu.CompilerParams(
        dimension_semantics=("parallel", "parallel"),
        vmem_limit_bytes=_VMEM_LIMIT_BYTES)

    # layout plumbing: NCHW -> NHWC, zero-pad, fold (W, C) onto lanes, gather
    # overlapping (TH+2)-row halo strips so plain Blocked specs can tile H.
    x_nhwc = jnp.transpose(x_nchw, (0, 2, 3, 1)).astype(jnp.float32)
    x_pad = jnp.pad(x_nhwc, ((0, 0), (1, 1), (1, 1), (0, 0)))
    x_strips = _gather_strips(x_pad.reshape(N, H + 2, Wp * Cin), TH)

    band1 = _toeplitz_band(w1, W).astype(mxu_dtype)        # (3, Wp*Cin, WC)
    band2 = _toeplitz_band(w2, W).astype(mxu_dtype)        # (3, Wp*Cout, WC)
    bias1 = jnp.tile(b1, W)[None, :].astype(jnp.float32)   # (1, WC)
    bias2 = jnp.tile(b2, W)[None, :].astype(jnp.float32)

    # ---------------- stage 1: conv1 + bias, BN1 partial stats --------------
    y1_raw, st1 = pl.pallas_call(
        _conv1_kernel,
        grid=(N, nH),
        in_specs=[
            pl.BlockSpec((1, 1, TH + 2, Wp * Cin), lambda n, i: (n, i, 0, 0)),
            pl.BlockSpec((3, Wp * Cin, WC), lambda n, i: (0, 0, 0)),
            pl.BlockSpec((1, WC), lambda n, i: (0, 0)),
        ],
        out_specs=(
            pl.BlockSpec((1, TH, WC), lambda n, i: (n, i, 0)),
            pl.BlockSpec((1, 1, 2, WC), lambda n, i: (n, i, 0, 0)),
        ),
        out_shape=(
            jax.ShapeDtypeStruct((N, H, WC), jnp.float32),
            jax.ShapeDtypeStruct((N, nH, 2, WC), jnp.float32),
        ),
        compiler_params=cparams,
    )(x_strips, band1, bias1)

    scale1, shift1 = _bn_affine(st1, g1, be1, N * H * W, Cout)

    # ---------------- stage 2: BN1+ReLU -> conv2 + bias, BN2 partial stats --
    y1_pad = jnp.pad(y1_raw.reshape(N, H, W, Cout),
                     ((0, 0), (1, 1), (1, 1), (0, 0)))
    y1_strips = _gather_strips(y1_pad.reshape(N, H + 2, Wp * Cout), TH)
    scale1_t = jnp.tile(scale1, Wp)[None, :]
    shift1_t = jnp.tile(shift1, Wp)[None, :]

    y2_raw, st2 = pl.pallas_call(
        functools.partial(_bn_relu_conv2_kernel, W=W, Cout=Cout),
        grid=(N, nH),
        in_specs=[
            pl.BlockSpec((1, 1, TH + 2, Wp * Cout), lambda n, i: (n, i, 0, 0)),
            pl.BlockSpec((3, Wp * Cout, WC), lambda n, i: (0, 0, 0)),
            pl.BlockSpec((1, WC), lambda n, i: (0, 0)),
            pl.BlockSpec((1, Wp * Cout), lambda n, i: (0, 0)),
            pl.BlockSpec((1, Wp * Cout), lambda n, i: (0, 0)),
        ],
        out_specs=(
            pl.BlockSpec((1, TH, WC), lambda n, i: (n, i, 0)),
            pl.BlockSpec((1, 1, 2, WC), lambda n, i: (n, i, 0, 0)),
        ),
        out_shape=(
            jax.ShapeDtypeStruct((N, H, WC), jnp.float32),
            jax.ShapeDtypeStruct((N, nH, 2, WC), jnp.float32),
        ),
        compiler_params=cparams,
    )(y1_strips, band2, bias2, scale1_t, shift1_t)

    scale2, shift2 = _bn_affine(st2, g2, be2, N * H * W, Cout)

    # ---------------- stage 3: BN2 normalization (no trailing ReLU) ---------
    out_raw = pl.pallas_call(
        _bn2_kernel,
        grid=(N, nH),
        in_specs=[
            pl.BlockSpec((1, TH, WC), lambda n, i: (n, i, 0)),
            pl.BlockSpec((1, WC), lambda n, i: (0, 0)),
            pl.BlockSpec((1, WC), lambda n, i: (0, 0)),
        ],
        out_specs=pl.BlockSpec((1, TH, WC), lambda n, i: (n, i, 0)),
        out_shape=jax.ShapeDtypeStruct((N, H, WC), jnp.float32),
        compiler_params=cparams,
    )(y2_raw, jnp.tile(scale2, W)[None, :], jnp.tile(shift2, W)[None, :])

    out = out_raw.reshape(N, H, W, Cout)
    return jnp.transpose(out, (0, 3, 1, 2))                # back to NCHW


# ----------------------------------------------------------------------------
# params / reference / self-test
# ----------------------------------------------------------------------------
def init_params(key, in_channels, out_channels):
    """Deterministic synthetic parameters (Conv weights HWIO, BN affine)."""
    k1, k2, k3, k4 = jax.random.split(key, 4)
    fan1 = in_channels * 9
    fan2 = out_channels * 9
    w1 = jax.random.uniform(k1, (3, 3, in_channels, out_channels),
                            jnp.float32, -1.0, 1.0) / jnp.sqrt(fan1)
    b1 = jax.random.uniform(k2, (out_channels,), jnp.float32, -1.0, 1.0) / jnp.sqrt(fan1)
    w2 = jax.random.uniform(k3, (3, 3, out_channels, out_channels),
                            jnp.float32, -1.0, 1.0) / jnp.sqrt(fan2)
    b2 = jax.random.uniform(k4, (out_channels,), jnp.float32, -1.0, 1.0) / jnp.sqrt(fan2)
    g1 = jnp.ones((out_channels,), jnp.float32)
    be1 = jnp.zeros((out_channels,), jnp.float32)
    g2 = jnp.ones((out_channels,), jnp.float32)
    be2 = jnp.zeros((out_channels,), jnp.float32)
    return (w1, b1, g1, be1, w2, b2, g2, be2)


def _reference(x_nchw, params):
    """Pure-JAX reference (lax conv + training-mode BN) for validation."""
    w1, b1, g1, be1, w2, b2, g2, be2 = params
    x = jnp.transpose(x_nchw, (0, 2, 3, 1))
    dn = jax.lax.conv_dimension_numbers(x.shape, w1.shape, ("NHWC", "HWIO", "NHWC"))

    def bn(y, g, b):
        m = jnp.mean(y, axis=(0, 1, 2), keepdims=True)
        v = jnp.mean((y - m) ** 2, axis=(0, 1, 2), keepdims=True)
        return (y - m) * jax.lax.rsqrt(v + EPS) * g + b

    y = jax.lax.conv_general_dilated(x, w1, (1, 1), "SAME", dimension_numbers=dn) + b1
    y = jnp.maximum(bn(y, g1, be1), 0.0)
    y = jax.lax.conv_general_dilated(y, w2, (1, 1), "SAME", dimension_numbers=dn) + b2
    y = bn(y, g2, be2)
    return jnp.transpose(y, (0, 3, 1, 2))


if __name__ == "__main__":
    key = jax.random.PRNGKey(0)
    kx, kp = jax.random.split(key)

    N, Cin, Cout, H, W = 2, 4, 8, 16, 16
    x = jax.random.normal(kx, (N, Cin, H, W), jnp.float32)
    params = init_params(kp, Cin, Cout)

    # strip_rows=8 -> grid (N=2, H-strips=2): exercises halo tiling + the
    # cross-tile BatchNorm reduction even at this small demo size.
    out = double_conv(x, params, strip_rows=8)
    out = jax.block_until_ready(out)

    ref = _reference(x, params)
    assert out.shape == (N, Cout, H, W)
    err = float(jnp.max(jnp.abs(out - ref)))
    assert jnp.allclose(out, ref, atol=1e-4, rtol=1e-4), (
        f"mismatch vs reference, max abs err {err:.3e}")

    print("KERNEL_OK")
</pallas_src>

<mosaic_0001>
module attributes {stable_mosaic.version = 11 : i64} {
  func.func @_conv1_kernel(%arg0: i32, %arg1: i32, %arg2: memref<1x1x10x72xf32, #tpu.memory_space<vmem>>, %arg3: memref<3x72x128xf32, #tpu.memory_space<vmem>>, %arg4: memref<1x128xf32, #tpu.memory_space<vmem>>, %arg5: memref<1x8x128xf32, #tpu.memory_space<vmem>>, %arg6: memref<1x1x2x128xf32, #tpu.memory_space<vmem>>) attributes {dimension_semantics = [#tpu.dimension_semantics<parallel>, #tpu.dimension_semantics<parallel>], iteration_bounds = array<i64: 2, 2>, scalar_prefetch = 0 : i64, scratch_operands = 0 : i64, tpu.core_type = #tpu.core_type<tc>, window_params = [{transform_indices = @transform_0, window_bounds = array<i64: 1, 1, 10, 72>}, {pipeline_mode = #tpu.pipeline_mode<synchronous>, transform_indices = @transform_1, window_bounds = array<i64: 3, 72, 128>}, {pipeline_mode = #tpu.pipeline_mode<synchronous>, transform_indices = @transform_2, window_bounds = array<i64: 1, 128>}, {transform_indices = @transform_3, window_bounds = array<i64: 1, 8, 128>}, {transform_indices = @transform_4, window_bounds = array<i64: 1, 1, 2, 128>}]} {
    %c0 = arith.constant 0 : index
    %c0_0 = arith.constant 0 : index
    %c0_1 = arith.constant 0 : index
    %c0_2 = arith.constant 0 : index
    %0 = vector.load %arg2[%c0, %c0_0, %c0_1, %c0_2] : memref<1x1x10x72xf32, #tpu.memory_space<vmem>>, vector<1x1x10x72xf32>
    %1 = vector.shape_cast %0 : vector<1x1x10x72xf32> to vector<10x72xf32>
    %2 = vector.extract_strided_slice %1 {offsets = [0, 0], sizes = [8, 72], strides = [1, 1]} : vector<10x72xf32> to vector<8x72xf32>
    %c0_3 = arith.constant 0 : index
    %c0_4 = arith.constant 0 : index
    %c0_5 = arith.constant 0 : index
    %3 = vector.load %arg3[%c0_3, %c0_4, %c0_5] : memref<3x72x128xf32, #tpu.memory_space<vmem>>, vector<1x72x128xf32>
    %4 = vector.shape_cast %3 : vector<1x72x128xf32> to vector<72x128xf32>
    %cst = arith.constant dense<0.000000e+00> : vector<8x128xf32>
    %5 = tpu.matmul %2, %4, %cst {dimension_numbers = #tpu.dot_dimension_numbers<[1], [0], [0], [1], [0, 0, 1, 1], [], []>} : vector<8x72xf32>, vector<72x128xf32>, vector<8x128xf32> -> vector<8x128xf32>
    %6 = vector.extract_strided_slice %1 {offsets = [1, 0], sizes = [8, 72], strides = [1, 1]} : vector<10x72xf32> to vector<8x72xf32>
    %c1 = arith.constant 1 : index
    %c0_6 = arith.constant 0 : index
    %c0_7 = arith.constant 0 : index
    %7 = vector.load %arg3[%c1, %c0_6, %c0_7] : memref<3x72x128xf32, #tpu.memory_space<vmem>>, vector<1x72x128xf32>
    %8 = vector.shape_cast %7 : vector<1x72x128xf32> to vector<72x128xf32>
    %cst_8 = arith.constant dense<0.000000e+00> : vector<8x128xf32>
    %9 = tpu.matmul %6, %8, %cst_8 {dimension_numbers = #tpu.dot_dimension_numbers<[1], [0], [0], [1], [0, 0, 1, 1], [], []>} : vector<8x72xf32>, vector<72x128xf32>, vector<8x128xf32> -> vector<8x128xf32>
    %10 = arith.addf %5, %9 : vector<8x128xf32>
    %11 = vector.extract_strided_slice %1 {offsets = [2, 0], sizes = [8, 72], strides = [1, 1]} : vector<10x72xf32> to vector<8x72xf32>
    %c2 = arith.constant 2 : index
    %c0_9 = arith.constant 0 : index
    %c0_10 = arith.constant 0 : index
    %12 = vector.load %arg3[%c2, %c0_9, %c0_10] : memref<3x72x128xf32, #tpu.memory_space<vmem>>, vector<1x72x128xf32>
    %13 = vector.shape_cast %12 : vector<1x72x128xf32> to vector<72x128xf32>
    %cst_11 = arith.constant dense<0.000000e+00> : vector<8x128xf32>
    %14 = tpu.matmul %11, %13, %cst_11 {dimension_numbers = #tpu.dot_dimension_numbers<[1], [0], [0], [1], [0, 0, 1, 1], [], []>} : vector<8x72xf32>, vector<72x128xf32>, vector<8x128xf32> -> vector<8x128xf32>
    %15 = arith.addf %10, %14 : vector<8x128xf32>
    %c0_12 = arith.constant 0 : index
    %c0_13 = arith.constant 0 : index
    %16 = vector.load %arg4[%c0_12, %c0_13] : memref<1x128xf32, #tpu.memory_space<vmem>>, vector<1x128xf32>
    %17 = vector.broadcast %16 : vector<1x128xf32> to vector<8x128xf32>
    %18 = arith.addf %15, %17 : vector<8x128xf32>
    %c0_14 = arith.constant 0 : index
    %c0_15 = arith.constant 0 : index
    %c0_16 = arith.constant 0 : index
    %19 = vector.load %arg5[%c0_14, %c0_15, %c0_16] : memref<1x8x128xf32, #tpu.memory_space<vmem>>, vector<1x8x128xf32>
    %20 = vector.shape_cast %19 : vector<1x8x128xf32> to vector<8x128xf32>
    %21 = vector.shape_cast %18 : vector<8x128xf32> to vector<1x8x128xf32>
    tpu.vector_store %arg5[%c0_14, %c0_15, %c0_16], %21 {strides = array<i32>} : memref<1x8x128xf32, #tpu.memory_space<vmem>>, vector<1x8x128xf32>,
    %cst_17 = arith.constant dense<0.000000e+00> : vector<128xf32>
    %22 = vector.multi_reduction <add>, %18, %cst_17 [0] : vector<8x128xf32> to vector<128xf32>
    %23 = vector.shape_cast %22 : vector<128xf32> to vector<1x128xf32>
    %24 = arith.mulf %18, %18 : vector<8x128xf32>
    %cst_18 = arith.constant dense<0.000000e+00> : vector<128xf32>
    %25 = vector.multi_reduction <add>, %24, %cst_18 [0] : vector<8x128xf32> to vector<128xf32>
    %26 = vector.shape_cast %25 : vector<128xf32> to vector<1x128xf32>
    %27 = tpu.concatenate %23, %26 in 0 : vector<1x128xf32>, vector<1x128xf32> -> vector<2x128xf32>
    %c0_19 = arith.constant 0 : index
    %c0_20 = arith.constant 0 : index
    %c0_21 = arith.constant 0 : index
    %c0_22 = arith.constant 0 : index
    %28 = vector.load %arg6[%c0_19, %c0_20, %c0_21, %c0_22] : memref<1x1x2x128xf32, #tpu.memory_space<vmem>>, vector<1x1x2x128xf32>
    %29 = vector.shape_cast %28 : vector<1x1x2x128xf32> to vector<2x128xf32>
    %30 = vector.shape_cast %27 : vector<2x128xf32> to vector<1x1x2x128xf32>
    tpu.vector_store %arg6[%c0_19, %c0_20, %c0_21, %c0_22], %30 {strides = array<i32>} : memref<1x1x2x128xf32, #tpu.memory_space<vmem>>, vector<1x1x2x128xf32>,
    return
  }
  func.func @transform_0(%arg0: i32, %arg1: i32) -> (i32, i32, i32, i32) {
    %c0_i32 = arith.constant 0 : i32
    %c0_i32_0 = arith.constant 0 : i32
    %c0_i32_1 = arith.constant 0 : i32
    return %arg0, %arg1, %c0_i32, %c0_i32_0 : i32, i32, i32, i32
  }
  func.func @transform_1(%arg0: i32, %arg1: i32) -> (i32, i32, i32) {
    %c0_i32 = arith.constant 0 : i32
    %c0_i32_0 = arith.constant 0 : i32
    %c0_i32_1 = arith.constant 0 : i32
    %c0_i32_2 = arith.constant 0 : i32
    return %c0_i32, %c0_i32_0, %c0_i32_1 : i32, i32, i32
  }
  func.func @transform_2(%arg0: i32, %arg1: i32) -> (i32, i32) {
    %c0_i32 = arith.constant 0 : i32
    %c0_i32_0 = arith.constant 0 : i32
    %c0_i32_1 = arith.constant 0 : i32
    return %c0_i32, %c0_i32_0 : i32, i32
  }
  func.func @transform_3(%arg0: i32, %arg1: i32) -> (i32, i32, i32) {
    %c0_i32 = arith.constant 0 : i32
    %c0_i32_0 = arith.constant 0 : i32
    return %arg0, %arg1, %c0_i32 : i32, i32, i32
  }
  func.func @transform_4(%arg0: i32, %arg1: i32) -> (i32, i32, i32, i32) {
    %c0_i32 = arith.constant 0 : i32
    %c0_i32_0 = arith.constant 0 : i32
    %c0_i32_1 = arith.constant 0 : i32
    return %arg0, %arg1, %c0_i32, %c0_i32_0 : i32, i32, i32, i32
  }
}

module attributes {stable_mosaic.version = 11 : i64} {
  func.func @_bn_relu_conv2_kernel(%arg0: i32, %arg1: i32, %arg2: memref<1x1x10x144xf32, #tpu.memory_space<vmem>>, %arg3: memref<3x144x128xf32, #tpu.memory_space<vmem>>, %arg4: memref<1x128xf32, #tpu.memory_space<vmem>>, %arg5: memref<1x144xf32, #tpu.memory_space<vmem>>, %arg6: memref<1x144xf32, #tpu.memory_space<vmem>>, %arg7: memref<1x8x128xf32, #tpu.memory_space<vmem>>, %arg8: memref<1x1x2x128xf32, #tpu.memory_space<vmem>>) attributes {dimension_semantics = [#tpu.dimension_semantics<parallel>, #tpu.dimension_semantics<parallel>], iteration_bounds = array<i64: 2, 2>, scalar_prefetch = 0 : i64, scratch_operands = 0 : i64, tpu.core_type = #tpu.core_type<tc>, window_params = [{transform_indices = @transform_0, window_bounds = array<i64: 1, 1, 10, 144>}, {pipeline_mode = #tpu.pipeline_mode<synchronous>, transform_indices = @transform_1, window_bounds = array<i64: 3, 144, 128>}, {pipeline_mode = #tpu.pipeline_mode<synchronous>, transform_indices = @transform_2, window_bounds = array<i64: 1, 128>}, {pipeline_mode = #tpu.pipeline_mode<synchronous>, transform_indices = @transform_3, window_bounds = array<i64: 1, 144>}, {pipeline_mode = #tpu.pipeline_mode<synchronous>, transform_indices = @transform_4, window_bounds = array<i64: 1, 144>}, {transform_indices = @transform_5, window_bounds = array<i64: 1, 8, 128>}, {transform_indices = @transform_6, window_bounds = array<i64: 1, 1, 2, 128>}]} {
    %c0 = arith.constant 0 : index
    %c0_0 = arith.constant 0 : index
    %c0_1 = arith.constant 0 : index
    %c0_2 = arith.constant 0 : index
    %0 = vector.load %arg2[%c0, %c0_0, %c0_1, %c0_2] : memref<1x1x10x144xf32, #tpu.memory_space<vmem>>, vector<1x1x10x144xf32>
    %1 = vector.shape_cast %0 : vector<1x1x10x144xf32> to vector<10x144xf32>
    %c0_3 = arith.constant 0 : index
    %c0_4 = arith.constant 0 : index
    %2 = vector.load %arg5[%c0_3, %c0_4] : memref<1x144xf32, #tpu.memory_space<vmem>>, vector<1x144xf32>
    %3 = vector.broadcast %2 : vector<1x144xf32> to vector<10x144xf32>
    %4 = arith.mulf %1, %3 : vector<10x144xf32>
    %c0_5 = arith.constant 0 : index
    %c0_6 = arith.constant 0 : index
    %5 = vector.load %arg6[%c0_5, %c0_6] : memref<1x144xf32, #tpu.memory_space<vmem>>, vector<1x144xf32>
    %6 = vector.broadcast %5 : vector<1x144xf32> to vector<10x144xf32>
    %7 = arith.addf %4, %6 : vector<10x144xf32>
    %cst = arith.constant 0.000000e+00 : f32
    %8 = vector.broadcast %cst : f32 to vector<10x144xf32>
    %9 = arith.maximumf %7, %8 : vector<10x144xf32>
    %10 = tpu.iota {dimensions = array<i32: 1>} : vector<1x144xi32>
    %c8_i32 = arith.constant 8 : i32
    %11 = vector.broadcast %c8_i32 : i32 to vector<1x144xi32>
    %12 = arith.cmpi sge, %10, %11 : vector<1x144xi32>
    %c136_i32 = arith.constant 136 : i32
    %13 = vector.broadcast %c136_i32 : i32 to vector<1x144xi32>
    %14 = arith.cmpi slt, %10, %13 : vector<1x144xi32>
    %15 = arith.andi %12, %14 : vector<1x144xi1>
    %16 = tpu.iota {dimensions = array<i32: 0>} : vector<10x1xi32>
    %c0_i32 = arith.constant 0 : i32
    %17 = vector.broadcast %c0_i32 : i32 to vector<10x1xi32>
    %18 = arith.cmpi eq, %16, %17 : vector<10x1xi32>
    %c0_i32_7 = arith.constant 0 : i32
    %19 = arith.cmpi eq, %arg1, %c0_i32_7 : i32
    %20 = vector.broadcast %19 : i1 to vector<10x1xi1>
    %21 = arith.andi %18, %20 : vector<10x1xi1>
    %c9_i32 = arith.constant 9 : i32
    %22 = vector.broadcast %c9_i32 : i32 to vector<10x1xi32>
    %23 = arith.cmpi eq, %16, %22 : vector<10x1xi32>
    %c1_i32 = arith.constant 1 : i32
    %24 = arith.cmpi eq, %arg1, %c1_i32 : i32
    %25 = vector.broadcast %24 : i1 to vector<10x1xi1>
    %26 = arith.andi %23, %25 : vector<10x1xi1>
    %27 = arith.ori %21, %26 : vector<10x1xi1>
    %cst_8 = arith.constant dense<true> : vector<10x1xi1>
    %28 = arith.xori %27, %cst_8 : vector<10x1xi1>
    %29 = vector.broadcast %15 : vector<1x144xi1> to vector<10x144xi1>
    %30 = vector.broadcast %28 : vector<10x1xi1> to vector<10x144xi1>
    %31 = arith.andi %29, %30 : vector<10x144xi1>
    %cst_9 = arith.constant 0.000000e+00 : f32
    %32 = vector.broadcast %cst_9 : f32 to vector<10x144xf32>
    %33 = arith.select %31, %9, %32 : vector<10x144xi1>, vector<10x144xf32>
    %34 = vector.extract_strided_slice %33 {offsets = [0, 0], sizes = [8, 144], strides = [1, 1]} : vector<10x144xf32> to vector<8x144xf32>
    %c0_10 = arith.constant 0 : index
    %c0_11 = arith.constant 0 : index
    %c0_12 = arith.constant 0 : index
    %35 = vector.load %arg3[%c0_10, %c0_11, %c0_12] : memref<3x144x128xf32, #tpu.memory_space<vmem>>, vector<1x144x128xf32>
    %36 = vector.shape_cast %35 : vector<1x144x128xf32> to vector<144x128xf32>
    %cst_13 = arith.constant dense<0.000000e+00> : vector<8x128xf32>
    %37 = tpu.matmul %34, %36, %cst_13 {dimension_numbers = #tpu.dot_dimension_numbers<[1], [0], [0], [1], [0, 0, 1, 1], [], []>} : vector<8x144xf32>, vector<144x128xf32>, vector<8x128xf32> -> vector<8x128xf32>
    %38 = vector.extract_strided_slice %33 {offsets = [1, 0], sizes = [8, 144], strides = [1, 1]} : vector<10x144xf32> to vector<8x144xf32>
    %c1 = arith.constant 1 : index
    %c0_14 = arith.constant 0 : index
    %c0_15 = arith.constant 0 : index
    %39 = vector.load %arg3[%c1, %c0_14, %c0_15] : memref<3x144x128xf32, #tpu.memory_space<vmem>>, vector<1x144x128xf32>
    %40 = vector.shape_cast %39 : vector<1x144x128xf32> to vector<144x128xf32>
    %cst_16 = arith.constant dense<0.000000e+00> : vector<8x128xf32>
    %41 = tpu.matmul %38, %40, %cst_16 {dimension_numbers = #tpu.dot_dimension_numbers<[1], [0], [0], [1], [0, 0, 1, 1], [], []>} : vector<8x144xf32>, vector<144x128xf32>, vector<8x128xf32> -> vector<8x128xf32>
    %42 = arith.addf %37, %41 : vector<8x128xf32>
    %43 = vector.extract_strided_slice %33 {offsets = [2, 0], sizes = [8, 144], strides = [1, 1]} : vector<10x144xf32> to vector<8x144xf32>
    %c2 = arith.constant 2 : index
    %c0_17 = arith.constant 0 : index
    %c0_18 = arith.constant 0 : index
    %44 = vector.load %arg3[%c2, %c0_17, %c0_18] : memref<3x144x128xf32, #tpu.memory_space<vmem>>, vector<1x144x128xf32>
    %45 = vector.shape_cast %44 : vector<1x144x128xf32> to vector<144x128xf32>
    %cst_19 = arith.constant dense<0.000000e+00> : vector<8x128xf32>
    %46 = tpu.matmul %43, %45, %cst_19 {dimension_numbers = #tpu.dot_dimension_numbers<[1], [0], [0], [1], [0, 0, 1, 1], [], []>} : vector<8x144xf32>, vector<144x128xf32>, vector<8x128xf32> -> vector<8x128xf32>
    %47 = arith.addf %42, %46 : vector<8x128xf32>
    %c0_20 = arith.constant 0 : index
    %c0_21 = arith.constant 0 : index
    %48 = vector.load %arg4[%c0_20, %c0_21] : memref<1x128xf32, #tpu.memory_space<vmem>>, vector<1x128xf32>
    %49 = vector.broadcast %48 : vector<1x128xf32> to vector<8x128xf32>
    %50 = arith.addf %47, %49 : vector<8x128xf32>
    %c0_22 = arith.constant 0 : index
    %c0_23 = arith.constant 0 : index
    %c0_24 = arith.constant 0 : index
    %51 = vector.load %arg7[%c0_22, %c0_23, %c0_24] : memref<1x8x128xf32, #tpu.memory_space<vmem>>, vector<1x8x128xf32>
    %52 = vector.shape_cast %51 : vector<1x8x128xf32> to vector<8x128xf32>
    %53 = vector.shape_cast %50 : vector<8x128xf32> to vector<1x8x128xf32>
    tpu.vector_store %arg7[%c0_22, %c0_23, %c0_24], %53 {strides = array<i32>} : memref<1x8x128xf32, #tpu.memory_space<vmem>>, vector<1x8x128xf32>,
    %cst_25 = arith.constant dense<0.000000e+00> : vector<128xf32>
    %54 = vector.multi_reduction <add>, %50, %cst_25 [0] : vector<8x128xf32> to vector<128xf32>
    %55 = vector.shape_cast %54 : vector<128xf32> to vector<1x128xf32>
    %56 = arith.mulf %50, %50 : vector<8x128xf32>
    %cst_26 = arith.constant dense<0.000000e+00> : vector<128xf32>
    %57 = vector.multi_reduction <add>, %56, %cst_26 [0] : vector<8x128xf32> to vector<128xf32>
    %58 = vector.shape_cast %57 : vector<128xf32> to vector<1x128xf32>
    %59 = tpu.concatenate %55, %58 in 0 : vector<1x128xf32>, vector<1x128xf32> -> vector<2x128xf32>
    %c0_27 = arith.constant 0 : index
    %c0_28 = arith.constant 0 : index
    %c0_29 = arith.constant 0 : index
    %c0_30 = arith.constant 0 : index
    %60 = vector.load %arg8[%c0_27, %c0_28, %c0_29, %c0_30] : memref<1x1x2x128xf32, #tpu.memory_space<vmem>>, vector<1x1x2x128xf32>
    %61 = vector.shape_cast %60 : vector<1x1x2x128xf32> to vector<2x128xf32>
    %62 = vector.shape_cast %59 : vector<2x128xf32> to vector<1x1x2x128xf32>
    tpu.vector_store %arg8[%c0_27, %c0_28, %c0_29, %c0_30], %62 {strides = array<i32>} : memref<1x1x2x128xf32, #tpu.memory_space<vmem>>, vector<1x1x2x128xf32>,
    return
  }
  func.func @transform_0(%arg0: i32, %arg1: i32) -> (i32, i32, i32, i32) {
    %c0_i32 = arith.constant 0 : i32
    %c0_i32_0 = arith.constant 0 : i32
    %c0_i32_1 = arith.constant 0 : i32
    return %arg0, %arg1, %c0_i32, %c0_i32_0 : i32, i32, i32, i32
  }
  func.func @transform_1(%arg0: i32, %arg1: i32) -> (i32, i32, i32) {
    %c0_i32 = arith.constant 0 : i32
    %c0_i32_0 = arith.constant 0 : i32
    %c0_i32_1 = arith.constant 0 : i32
    %c0_i32_2 = arith.constant 0 : i32
    return %c0_i32, %c0_i32_0, %c0_i32_1 : i32, i32, i32
  }
  func.func @transform_2(%arg0: i32, %arg1: i32) -> (i32, i32) {
    %c0_i32 = arith.constant 0 : i32
    %c0_i32_0 = arith.constant 0 : i32
    %c0_i32_1 = arith.constant 0 : i32
    return %c0_i32, %c0_i32_0 : i32, i32
  }
  func.func @transform_3(%arg0: i32, %arg1: i32) -> (i32, i32) {
    %c0_i32 = arith.constant 0 : i32
    %c0_i32_0 = arith.constant 0 : i32
    %c0_i32_1 = arith.constant 0 : i32
    return %c0_i32, %c0_i32_0 : i32, i32
  }
  func.func @transform_4(%arg0: i32, %arg1: i32) -> (i32, i32) {
    %c0_i32 = arith.constant 0 : i32
    %c0_i32_0 = arith.constant 0 : i32
    %c0_i32_1 = arith.constant 0 : i32
    return %c0_i32, %c0_i32_0 : i32, i32
  }
  func.func @transform_5(%arg0: i32, %arg1: i32) -> (i32, i32, i32) {
    %c0_i32 = arith.constant 0 : i32
    %c0_i32_0 = arith.constant 0 : i32
    return %arg0, %arg1, %c0_i32 : i32, i32, i32
  }
  func.func @transform_6(%arg0: i32, %arg1: i32) -> (i32, i32, i32, i32) {
    %c0_i32 = arith.constant 0 : i32
    %c0_i32_0 = arith.constant 0 : i32
    %c0_i32_1 = arith.constant 0 : i32
    return %arg0, %arg1, %c0_i32, %c0_i32_0 : i32, i32, i32, i32
  }
}

module attributes {stable_mosaic.version = 11 : i64} {
  func.func @_bn2_kernel(%arg0: i32, %arg1: i32, %arg2: memref<1x8x128xf32, #tpu.memory_space<vmem>>, %arg3: memref<1x128xf32, #tpu.memory_space<vmem>>, %arg4: memref<1x128xf32, #tpu.memory_space<vmem>>, %arg5: memref<1x8x128xf32, #tpu.memory_space<vmem>>) attributes {dimension_semantics = [#tpu.dimension_semantics<parallel>, #tpu.dimension_semantics<parallel>], iteration_bounds = array<i64: 2, 2>, scalar_prefetch = 0 : i64, scratch_operands = 0 : i64, tpu.core_type = #tpu.core_type<tc>, window_params = [{transform_indices = @transform_0, window_bounds = array<i64: 1, 8, 128>}, {pipeline_mode = #tpu.pipeline_mode<synchronous>, transform_indices = @transform_1, window_bounds = array<i64: 1, 128>}, {pipeline_mode = #tpu.pipeline_mode<synchronous>, transform_indices = @transform_2, window_bounds = array<i64: 1, 128>}, {transform_indices = @transform_3, window_bounds = array<i64: 1, 8, 128>}]} {
    %c0 = arith.constant 0 : index
    %c0_0 = arith.constant 0 : index
    %c0_1 = arith.constant 0 : index
    %0 = vector.load %arg2[%c0, %c0_0, %c0_1] : memref<1x8x128xf32, #tpu.memory_space<vmem>>, vector<1x8x128xf32>
    %1 = vector.shape_cast %0 : vector<1x8x128xf32> to vector<8x128xf32>
    %c0_2 = arith.constant 0 : index
    %c0_3 = arith.constant 0 : index
    %2 = vector.load %arg3[%c0_2, %c0_3] : memref<1x128xf32, #tpu.memory_space<vmem>>, vector<1x128xf32>
    %3 = vector.broadcast %2 : vector<1x128xf32> to vector<8x128xf32>
    %4 = arith.mulf %1, %3 : vector<8x128xf32>
    %c0_4 = arith.constant 0 : index
    %c0_5 = arith.constant 0 : index
    %5 = vector.load %arg4[%c0_4, %c0_5] : memref<1x128xf32, #tpu.memory_space<vmem>>, vector<1x128xf32>
    %6 = vector.broadcast %5 : vector<1x128xf32> to vector<8x128xf32>
    %7 = arith.addf %4, %6 : vector<8x128xf32>
    %c0_6 = arith.constant 0 : index
    %c0_7 = arith.constant 0 : index
    %c0_8 = arith.constant 0 : index
    %8 = vector.load %arg5[%c0_6, %c0_7, %c0_8] : memref<1x8x128xf32, #tpu.memory_space<vmem>>, vector<1x8x128xf32>
    %9 = vector.shape_cast %8 : vector<1x8x128xf32> to vector<8x128xf32>
    %10 = vector.shape_cast %7 : vector<8x128xf32> to vector<1x8x128xf32>
    tpu.vector_store %arg5[%c0_6, %c0_7, %c0_8], %10 {strides = array<i32>} : memref<1x8x128xf32, #tpu.memory_space<vmem>>, vector<1x8x128xf32>,
    return
  }
  func.func @transform_0(%arg0: i32, %arg1: i32) -> (i32, i32, i32) {
    %c0_i32 = arith.constant 0 : i32
    %c0_i32_0 = arith.constant 0 : i32
    return %arg0, %arg1, %c0_i32 : i32, i32, i32
  }
  func.func @transform_1(%arg0: i32, %arg1: i32) -> (i32, i32) {
    %c0_i32 = arith.constant 0 : i32
    %c0_i32_0 = arith.constant 0 : i32
    %c0_i32_1 = arith.constant 0 : i32
    return %c0_i32, %c0_i32_0 : i32, i32
  }
  func.func @transform_2(%arg0: i32, %arg1: i32) -> (i32, i32) {
    %c0_i32 = arith.constant 0 : i32
    %c0_i32_0 = arith.constant 0 : i32
    %c0_i32_1 = arith.constant 0 : i32
    return %c0_i32, %c0_i32_0 : i32, i32
  }
  func.func @transform_3(%arg0: i32, %arg1: i32) -> (i32, i32, i32) {
    %c0_i32 = arith.constant 0 : i32
    %c0_i32_0 = arith.constant 0 : i32
    return %arg0, %arg1, %c0_i32 : i32, i32, i32
  }
}

</mosaic_0001>

<llo_original>
// kernel: tile.33
$region0: #{tile.33}
  #allocation0 [shape = 's32[1]{0}', space=sflag, size = 0x4, scoped, tag = 'scoped memory for tile.33']
  %s0 = inlined_call_operand.vmem [shape: f32[8], index: 0, kind: input, shape index: {}]
  %s1 = inlined_call_operand.vmem [shape: f32[16,8], index: 1, kind: output, shape index: {}]
  // Predicated region
  $region2: #{tile.33} parent=0 // pred_check
    _
  $region3: #{tile.33} parent=0 // pred_check_branch
    %3 = sbr.rel (0) target = $region5
  $region4: #{tile.33} parent=0 // pred_region
    _
  $region5: #{tile.33} parent=0 // pred_fallthru
    _
  %v4 = vld [vmem:[%s0] ss:$0 sm:$0xff]
  %5 = vst [vmem:[%s1] sm:$0xff] %v4
  %s6 = scalar_lea.vmem %s1, 8
  %7 = vst [vmem:[%s6] sm:$0xff] %v4

// kernel: tile.34
$region0: #{tile.34}
  %s0 = inlined_call_operand.vmem [shape: f32[16,8], index: 0, kind: input, shape index: {}]
  %s1 = inlined_call_operand.vmem [shape: f32[1,128], index: 1, kind: output, shape index: {}]
  $region1: #{tile.34} parent=0
    #allocation0 [shape = 'u8[4096]{0}', space=vmem, size = 0x1000, scoped, tag = 'scoped mem for output reshape']
    %v2 = vld [vmem:[%s0] sm:$0x1]
    %vm3 = vcmask 64512
    %4 = vst.msk [vmem:[#allocation0] sm:$0x1] %vm3, %v2
    %s5 = scalar_lea.vmem %s0, 15
    %v6 = vld [vmem:[%s5] sm:$0x1]
    %7 = vrot.lane.b32.xlu0 %v6, 120
    %v8 = vpop.permute.xlu0 %7
    %vm9 = vcmask 1048512
    %10 = vst.msk [vmem:[#allocation0] sm:$0x1] %vm9, %v8
    %s11 = scalar_lea.vmem %s0, 14
    %v12 = vld [vmem:[%s11] sm:$0x1]
    %13 = vrot.lane.b32.xlu0 %v12, 112
    %v14 = vpop.permute.xlu0 %13
    %vm15 = vcmask 982912
    %16 = vst.msk [vmem:[#allocation0] sm:$0x1] %vm15, %v14
    %s17 = scalar_lea.vmem %s0, 13
    %v18 = vld [vmem:[%s17] sm:$0x1]
    %19 = vrot.lane.b32.xlu0 %v18, 104
    %v20 = vpop.permute.xlu0 %19
    %vm21 = vcmask 917312
    %22 = vst.msk [vmem:[#allocation0] sm:$0x1] %vm21, %v20
    %s23 = scalar_lea.vmem %s0, 12
    %v24 = vld [vmem:[%s23] sm:$0x1]
    %25 = vrot.lane.b32.xlu0 %v24, 96
    %v26 = vpop.permute.xlu0 %25
    %vm27 = vcmask 851712
    %28 = vst.msk [vmem:[#allocation0] sm:$0x1] %vm27, %v26
    %s29 = scalar_lea.vmem %s0, 11
    %v30 = vld [vmem:[%s29] sm:$0x1]
    %31 = vrot.lane.b32.xlu0 %v30, 88
    %v32 = vpop.permute.xlu0 %31
    %vm33 = vcmask 786112
    %34 = vst.msk [vmem:[#allocation0] sm:$0x1] %vm33, %v32
    %s35 = scalar_lea.vmem %s0, 10
    %v36 = vld [vmem:[%s35] sm:$0x1]
    %37 = vrot.lane.b32.xlu0 %v36, 80
    %v38 = vpop.permute.xlu0 %37
    %vm39 = vcmask 720512
    %40 = vst.msk [vmem:[#allocation0] sm:$0x1] %vm39, %v38
    %s41 = scalar_lea.vmem %s0, 9
    %v42 = vld [vmem:[%s41] sm:$0x1]
    %43 = vrot.lane.b32.xlu0 %v42, 72
    %v44 = vpop.permute.xlu0 %43
    %vm45 = vcmask 654912
    %46 = vst.msk [vmem:[#allocation0] sm:$0x1] %vm45, %v44
    %s47 = scalar_lea.vmem %s0, 8
    %v48 = vld [vmem:[%s47] sm:$0x1]
    %49 = vrot.lane.b32.xlu0 %v48, 64
    %v50 = vpop.permute.xlu0 %49
    %vm51 = vcmask 589312
    %52 = vst.msk [vmem:[#allocation0] sm:$0x1] %vm51, %v50
    %s53 = scalar_lea.vmem %s0, 7
    %v54 = vld [vmem:[%s53] sm:$0x1]
    %55 = vrot.lane.b32.xlu0 %v54, 56
    %v56 = vpop.permute.xlu0 %55
    %vm57 = vcmask 523712
    %58 = vst.msk [vmem:[#allocation0] sm:$0x1] %vm57, %v56
    %s59 = scalar_lea.vmem %s0, 6
    %v60 = vld [vmem:[%s59] sm:$0x1]
    %61 = vrot.lane.b32.xlu0 %v60, 48
    %v62 = vpop.permute.xlu0 %61
    %vm63 = vcmask 458112
    %64 = vst.msk [vmem:[#allocation0] sm:$0x1] %vm63, %v62
    %s65 = scalar_lea.vmem %s0, 5
    %v66 = vld [vmem:[%s65] sm:$0x1]
    %67 = vrot.lane.b32.xlu0 %v66, 40
    %v68 = vpop.permute.xlu0 %67
    %vm69 = vcmask 392512
    %70 = vst.msk [vmem:[#allocation0] sm:$0x1] %vm69, %v68
    %s71 = scalar_lea.vmem %s0, 4
    %v72 = vld [vmem:[%s71] sm:$0x1]
    %73 = vrot.lane.b32.xlu0 %v72, 32
    %v74 = vpop.permute.xlu0 %73
    %vm75 = vcmask 326912
    %76 = vst.msk [vmem:[#allocation0] sm:$0x1] %vm75, %v74
    %s77 = scalar_lea.vmem %s0, 3
    %v78 = vld [vmem:[%s77] sm:$0x1]
    %79 = vrot.lane.b32.xlu0 %v78, 24
    %v80 = vpop.permute.xlu0 %79
    %vm81 = vcmask 261312
    %82 = vst.msk [vmem:[#allocation0] sm:$0x1] %vm81, %v80
    %s83 = scalar_lea.vmem %s0, 2
    %v84 = vld [vmem:[%s83] sm:$0x1]
    %85 = vrot.lane.b32.xlu0 %v84, 16
    %v86 = vpop.permute.xlu0 %85
    %vm87 = vcmask 195712
    %88 = vst.msk [vmem:[#allocation0] sm:$0x1] %vm87, %v86
    %s89 = scalar_lea.vmem %s0, 1
    %v90 = vld [vmem:[%s89] sm:$0x1]
    %91 = vrot.lane.b32.xlu0 %v90, 8
    %v92 = vpop.permute.xlu0 %91
    %vm93 = vcmask 130112
    %94 = vst.msk [vmem:[#allocation0] sm:$0x1] %vm93, %v92
    %s96 = ssub.s32 2, 1
    %v97 = vld [vmem:[#allocation0] sm:%s96]
    %s99 = ssub.s32 2, 1
    %100 = vst [vmem:[%s1] sm:%s99] %v97

// kernel: double_conv.3
$region0: #{double_conv.3}
  #allocation0 [shape = 'u32[]', space=smem, size = 0x4, offset = 0x4, fixed_abs, tag = 'smem constant byte address 0x4 - core index']
  #allocation1 [shape = 'u32[72,128]{1,0:T(1,128)}', space=vmem, size = 0x9000, scoped, tag = 'internal scratch']
  %s0 = inlined_call_operand.vmem [shape: f32[2,2,10,72], index: 0, kind: input, shape index: {}]
  %s1 = inlined_call_operand.vmem [shape: f32[3,72,128], index: 1, kind: input, shape index: {}]
  %s2 = inlined_call_operand.vmem [shape: f32[1,128], index: 2, kind: input, shape index: {}]
  %s3 = inlined_call_operand.vmem [shape: f32[2,16,128], index: 3, kind: output, shape index: {0}]
  %s4 = inlined_call_operand.vmem [shape: f32[2,2,2,128], index: 4, kind: output, shape index: {1}]
  %5 = xla_tuple %s3, %s4
  %s6 = sld [smem:[#allocation0]]
  $region53: #{double_conv.3} parent=0
    _
  %s8 = ssub.s32 1, %s6
  %s9 = scalar_select 0, %s8, %s6
  loop: start=0, step=1, limit=6
  $region2: #{double_conv.3} parent=0 // loop_pre_header
    _
  $region3: #{double_conv.3} parent=0 // loop_header
    %s11 = sphi 0, %s15
    %p12 = scmp.ge.s32.totalorder %s11, 6
    %s18 = sphi 0, %s30
    %s19 = sphi 0, %s26
    %s20 = sphi 0, %s18
    %s21 = sphi 0, %s19
    %s22 = sphi 0, %s20
    %s23 = sphi 0, %s21
    %s35 = sphi 0, %s37
    %s38 = sphi 0, %s35
    %s39 = sphi 0, %s38
    %s55 = sphi 0, %s39
    %s59 = sphi 0, %s59
    %s61 = sphi 0, %s59
    %s62 = sphi 0, %s61
    %s76 = sphi 0, %s62
    %s80 = sphi 0, %s80
    %s82 = sphi 0, %s80
    %s83 = sphi 0, %s82
    %s97 = sphi 0, %s83
    %s105 = sphi 0, %s107
    %s108 = sphi 0, %s105
    %s109 = sphi 0, %s108
    %s125 = sphi 0, %s109
    %s133 = sphi 0, %s135
    %s136 = sphi 0, %s133
    %s137 = sphi 0, %s136
    %s153 = sphi 0, %s137
  $region4: #{double_conv.3} parent=0 // loop_header_branch
    %14 = sbr.rel (%p12) target = $region8
  $region5: #{double_conv.3} parent=0 // loop_body
    %s16 = ssub.s32 %s11, 1
    %s17 = ssub.s32 %s11, 2
    %s24 = sadd.s32 1, %s19
    %p25 = scmp.ge.s32.totalorder %s24, 2
    %s26 = scalar_select %p25, 0, %s24
    %s27 = sadd.s32 1, %s18
    %s28 = scalar_select %p25, %s27, %s18
    %p29 = scmp.ge.s32.totalorder %s28, 2
    %s30 = scalar_select %p29, 0, %s28
    %s31 = ssub.s32 %s18, %s30
    %s32 = ssub.s32 %s19, %s26
    %s33 = sor.u32 %s31, %s32
    %p34 = scmp.eq.s32.totalorder %s33, 0
    %s36 = sadd.s32 %s35, 1
    %s37 = scalar_select %p34, %s35, %s36
    %p40 = pneg %p34
    %p41 = scmp.eq.s32.totalorder %s11, 3
    %p42 = por %p40, %p41
    %p43 = scmp.ne.s32.totalorder %s35, %s38
    %p44 = scmp.eq.s32.totalorder %s11, 0
    %p45 = por %p43, %p44
    %p46 = scmp.ne.s32.totalorder %s35, %s38
    %p47 = scmp.eq.s32.totalorder %s16, 3
    %p48 = por %p46, %p47
    %p49 = scmp.ne.s32.totalorder %s38, %s39
    %p50 = scmp.eq.s32.totalorder %s16, 0
    %p51 = por %p49, %p50
    %p52 = scmp.ne.s32.totalorder %s38, %s39
    %p53 = scmp.eq.s32.totalorder %s17, 3
    %p54 = por %p52, %p53
    %p56 = scmp.ne.s32.totalorder %s39, %s55
    %p57 = scmp.eq.s32.totalorder %s17, 0
    %p58 = por %p56, %p57
    %s60 = sadd.s32 %s59, 1
    %p63 = scmp.eq.s32.totalorder %s11, 3
    %p64 = scmp.ne.s32.totalorder %s59, %s61
    %p65 = scmp.eq.s32.totalorder %s11, 0
    %p66 = por %p64, %p65
    %p67 = scmp.ne.s32.totalorder %s59, %s61
    %p68 = scmp.eq.s32.totalorder %s16, 3
    %p69 = por %p67, %p68
    %p70 = scmp.ne.s32.totalorder %s61, %s62
    %p71 = scmp.eq.s32.totalorder %s16, 0
    %p72 = por %p70, %p71
    %p73 = scmp.ne.s32.totalorder %s61, %s62
    %p74 = scmp.eq.s32.totalorder %s17, 3
    %p75 = por %p73, %p74
    %p77 = scmp.ne.s32.totalorder %s62, %s76
    %p78 = scmp.eq.s32.totalorder %s17, 0
    %p79 = por %p77, %p78
    %s81 = sadd.s32 %s80, 1
    %p84 = scmp.eq.s32.totalorder %s11, 3
    %p85 = scmp.ne.s32.totalorder %s80, %s82
    %p86 = scmp.eq.s32.totalorder %s11, 0
    %p87 = por %p85, %p86
    %p88 = scmp.ne.s32.totalorder %s80, %s82
    %p89 = scmp.eq.s32.totalorder %s16, 3
    %p90 = por %p88, %p89
    %p91 = scmp.ne.s32.totalorder %s82, %s83
    %p92 = scmp.eq.s32.totalorder %s16, 0
    %p93 = por %p91, %p92
    %p94 = scmp.ne.s32.totalorder %s82, %s83
    %p95 = scmp.eq.s32.totalorder %s17, 3
    %p96 = por %p94, %p95
    %p98 = scmp.ne.s32.totalorder %s83, %s97
    %p99 = scmp.eq.s32.totalorder %s17, 0
    %p100 = por %p98, %p99
    %s101 = ssub.s32 %s18, %s30
    %s102 = ssub.s32 %s19, %s26
    %s103 = sor.u32 %s101, %s102
    %p104 = scmp.eq.s32.totalorder %s103, 0
    %s106 = sadd.s32 %s105, 1
    %s107 = scalar_select %p104, %s105, %s106
    %p110 = pneg %p104
    %p111 = scmp.eq.s32.totalorder %s11, 3
    %p112 = por %p110, %p111
    %p113 = scmp.ne.s32.totalorder %s105, %s108
    %p114 = scmp.eq.s32.totalorder %s11, 0
    %p115 = por %p113, %p114
    %p116 = scmp.ne.s32.totalorder %s105, %s108
    %p117 = scmp.eq.s32.totalorder %s16, 3
    %p118 = por %p116, %p117
    %p119 = scmp.ne.s32.totalorder %s108, %s109
    %p120 = scmp.eq.s32.totalorder %s16, 0
    %p121 = por %p119, %p120
    %p122 = scmp.ne.s32.totalorder %s108, %s109
    %p123 = scmp.eq.s32.totalorder %s17, 3
    %p124 = por %p122, %p123
    %p126 = scmp.ne.s32.totalorder %s109, %s125
    %p127 = scmp.eq.s32.totalorder %s17, 0
    %p128 = por %p126, %p127
    %s129 = ssub.s32 %s18, %s30
    %s130 = ssub.s32 %s19, %s26
    %s131 = sor.u32 %s129, %s130
    %p132 = scmp.eq.s32.totalorder %s131, 0
    %s134 = sadd.s32 %s133, 1
    %s135 = scalar_select %p132, %s133, %s134
    %p138 = pneg %p132
    %p139 = scmp.eq.s32.totalorder %s11, 3
    %p140 = por %p138, %p139
    %p141 = scmp.ne.s32.totalorder %s133, %s136
    %p142 = scmp.eq.s32.totalorder %s11, 0
    %p143 = por %p141, %p142
    %p144 = scmp.ne.s32.totalorder %s133, %s136
    %p145 = scmp.eq.s32.totalorder %s16, 3
    %p146 = por %p144, %p145
    %p147 = scmp.ne.s32.totalorder %s136, %s137
    %p148 = scmp.eq.s32.totalorder %s16, 0
    %p149 = por %p147, %p148
    %p150 = scmp.ne.s32.totalorder %s136, %s137
    %p151 = scmp.eq.s32.totalorder %s17, 3
    %p152 = por %p150, %p151
    %p154 = scmp.ne.s32.totalorder %s137, %s153
    %p155 = scmp.eq.s32.totalorder %s17, 0
    %p156 = por %p154, %p155
    %p157 = scmp.le.s32.totalorder 1, %s11
    %p158 = scmp.lt.s32.totalorder %s11, 5
    %p159 = pnand %p157, %p158
    %p160 = pneg %p159
    // Predicated region
    $region9: #{double_conv.3} parent=5 // pred_check
      _
    $region10: #{double_conv.3} parent=5 // pred_check_branch
      %162 = sbr.rel (%p159) target = $region12
    $region11: #{double_conv.3} parent=5 // pred_region
      %s163 = ssub.s32 %s11, 1
      // Predicated region
      $region13: #{double_conv.3} parent=11 // pred_check
        %p164 = pneg %p72
      $region14: #{double_conv.3} parent=11 // pred_check_branch
        %166 = sbr.rel (%p164) target = $region16
      $region15: #{double_conv.3} parent=11 // pred_region
        _
      $region16: #{double_conv.3} parent=11 // pred_fallthru
        _
      // Predicated region
      $region17: #{double_conv.3} parent=11 // pred_check
        %p167 = pneg %p93
      $region18: #{double_conv.3} parent=11 // pred_check_branch
        %169 = sbr.rel (%p167) target = $region20
      $region19: #{double_conv.3} parent=11 // pred_region
        _
      $region20: #{double_conv.3} parent=11 // pred_fallthru
        _
    $region12: #{double_conv.3} parent=5 // pred_fallthru
      _
    %p170 = scmp.lt.s32.totalorder %s11, 4
    // Predicated region
    $region21: #{double_conv.3} parent=5 // pred_check
      %p171 = pneg %p170
    $region22: #{double_conv.3} parent=5 // pred_check_branch
      %173 = sbr.rel (%p171) target = $region24
    $region23: #{double_conv.3} parent=5 // pred_region
      // Predicated region
      $region25: #{double_conv.3} parent=23 // pred_check
        %p174 = pneg %p45
      $region26: #{double_conv.3} parent=23 // pred_check_branch
        %176 = sbr.rel (%p174) target = $region28
      $region27: #{double_conv.3} parent=23 // pred_region
        %p177 = scmp.lt.s32.totalorder %s18, 1
        %s178 = scalar_select %p177, %s18, 1
        %p179 = scmp.lt.s32.totalorder %s19, 1
        %s180 = scalar_select %p179, %s19, 1
        %s181 = smul.addr %s180, 2
        %s182 = smul.addr %s178, 4
        %s183 = sadd.s32 %s181, %s182
        %s184 = smul.addr %s183, 8
        %s185 = scalar_lea.vmem %s0, %s184
      $region28: #{double_conv.3} parent=23 // pred_fallthru
        _
    $region24: #{double_conv.3} parent=5 // pred_fallthru
      _
    %p186 = scmp.le.s32.totalorder 1, %s11
    %p187 = scmp.lt.s32.totalorder %s11, 5
    %p188 = pnand %p186, %p187
    %p189 = pneg %p188
    // Predicated region
    $region29: #{double_conv.3} parent=5 // pred_check
      _
    $region30: #{double_conv.3} parent=5 // pred_check_branch
      %191 = sbr.rel (%p188) target = $region32
    $region31: #{double_conv.3} parent=5 // pred_region
      %s192 = ssub.s32 %s11, 1
      %p193 = scmp.lt.s32.totalorder %s20, 1
      %s194 = scalar_select %p193, %s20, 1
      %p195 = scmp.lt.s32.totalorder %s21, 1
      %s196 = scalar_select %p195, %s21, 1
      %s197 = smul.addr %s196, 2
      %s198 = smul.addr %s194, 4
      %s199 = sadd.s32 %s197, %s198
      %s200 = smul.addr %s199, 8
      %s201 = scalar_lea.vmem %s0, %s200
      %p202 = pneg %p51
      %p203 = pneg %p48
      %p204 = pneg %p72
      %p205 = pneg %p69
      %p206 = pneg %p93
      %p207 = pneg %p90
      %p208 = pneg %p121
      %p209 = pneg %p118
      %p210 = scmp.lt.s32.totalorder %s20, 1
      %s211 = scalar_select %p210, %s20, 1
      %p212 = scmp.lt.s32.totalorder %s21, 1
      %s213 = scalar_select %p212, %s21, 1
      %s214 = smul.addr %s211, 2
      %s215 = sadd.s32 %s213, %s214
      %s216 = smul.addr %s215, 8
      %s217 = scalar_lea.vmem %s3, %s216
      %p218 = pneg %p149
      %p219 = pneg %p146
      %p220 = scmp.lt.s32.totalorder %s20, 1
      %s221 = scalar_select %p220, %s20, 1
      %p222 = scmp.lt.s32.totalorder %s21, 1
      %s223 = scalar_select %p222, %s21, 1
      %s224 = smul.addr %s221, 2
      %s225 = sadd.s32 %s223, %s224
      %s226 = smul.addr %s225, 2
      %s227 = scalar_lea.vmem %s4, %s226
      %p228 = scmp.lt.s32.totalorder %s20, 1
      %s229 = scalar_select %p228, %s20, 1
      %p230 = scmp.lt.s32.totalorder %s21, 1
      %s231 = scalar_select %p230, %s21, 1
      %s232 = smul.addr %s231, 2
      %s233 = smul.addr %s229, 4
      %s234 = sadd.s32 %s232, %s233
      %s235 = smul.addr %s234, 8
      %s236 = scalar_lea.vmem %s0, %s235
      %p237 = scmp.lt.s32.totalorder %s20, 1
      %s238 = scalar_select %p237, %s20, 1
      %p239 = scmp.lt.s32.totalorder %s21, 1
      %s240 = scalar_select %p239, %s21, 1
      %s241 = smul.addr %s238, 2
      %s242 = sadd.s32 %s240, %s241
      %s243 = smul.addr %s242, 8
      %s244 = scalar_lea.vmem %s3, %s243
      %p245 = scmp.lt.s32.totalorder %s20, 1
      %s246 = scalar_select %p245, %s20, 1
      %p247 = scmp.lt.s32.totalorder %s21, 1
      %s248 = scalar_select %p247, %s21, 1
      %s249 = smul.addr %s246, 2
      %s250 = sadd.s32 %s248, %s249
      %s251 = smul.addr %s250, 2
      %s252 = scalar_lea.vmem %s4, %s251
      %v253 = vld [vmem:[%s236] sm:$0xff]
      %v254 = vld [vmem:[%s236 + $0x8] sm:$0x3]
      %v255 = vld [vmem:[%s1] sm:$0xff]
      %v256 = vld [vmem:[%s1 + $0x8] sm:$0xff]
      %v257 = vld [vmem:[%s1 + $0x10] sm:$0xff]
      %v258 = vld [vmem:[%s1 + $0x18] sm:$0xff]
      %v259 = vld [vmem:[%s1 + $0x20] sm:$0xff]
      %v260 = vld [vmem:[%s1 + $0x28] sm:$0xff]
      %v261 = vld [vmem:[%s1 + $0x30] sm:$0xff]
      %v262 = vld [vmem:[%s1 + $0x38] sm:$0xff]
      %v263 = vld [vmem:[%s1 + $0x40] sm:$0xff]
      %s264 = scalar_lea.vmem %s1, 72
      %v265 = vld [vmem:[%s264] sm:$0xff]
      %v266 = vld [vmem:[%s264 + $0x8] sm:$0xff]
      %v267 = vld [vmem:[%s264 + $0x10] sm:$0xff]
      %v268 = vld [vmem:[%s264 + $0x18] sm:$0xff]
      %v269 = vld [vmem:[%s264 + $0x20] sm:$0xff]
      %v270 = vld [vmem:[%s264 + $0x28] sm:$0xff]
      %v271 = vld [vmem:[%s264 + $0x30] sm:$0xff]
      %v272 = vld [vmem:[%s264 + $0x38] sm:$0xff]
      %v273 = vld [vmem:[%s264 + $0x40] sm:$0xff]
      %vm276 = vcmask 1046528
      %v277 = vrot.slane %v253, 1
      %v278 = vrot.slane %v254, 1
      %v279 = vsel %vm276, %v277, %v278
      %vm280 = vcmask 588800
      %v281 = vsel %vm280, %v279, 0
      %283 = vmatpush.msra.mxu0 0.0
      %284 = vmatpush.msra.mxu0 0.0
      %285 = vmatpush.msra.mxu0 0.0
      %286 = vmatpush.msra.mxu0 0.0
      %287 = vmatpush.msra.mxu0 0.0
      %288 = vmatpush.msra.mxu0 0.0
      %289 = vmatpush.msra.mxu0 0.0
      %290 = vmatpush.msra.mxu0 %v273
      %291 = vmatpush.msra.mxu0 %v272
      %292 = vmatpush.msra.mxu0 %v271
      %293 = vmatpush.msra.mxu0 %v270
      %294 = vmatpush.msra.mxu0 %v269
      %295 = vmatpush.msra.mxu0 %v268
      %296 = vmatpush.msra.mxu0 %v267
      %297 = vmatpush.msra.mxu0 %v266
      %298 = vmatpush.msra.mxu0 %v265
      %299 = vmatmul.f32.gmra.mxu0 %v281
      %v300 = vpop.f32.mrf.mxu0
      %v301 = vadd.f32 0.0, %v300
      %302 = vdwg.mxu0
      %v303 = vsel %vm280, %v253, 0
      %305 = vmatpush.msra.mxu0 0.0
      %306 = vmatpush.msra.mxu0 0.0
      %307 = vmatpush.msra.mxu0 0.0
      %308 = vmatpush.msra.mxu0 0.0
      %309 = vmatpush.msra.mxu0 0.0
      %310 = vmatpush.msra.mxu0 0.0
      %311 = vmatpush.msra.mxu0 0.0
      %312 = vmatpush.msra.mxu0 %v263
      %313 = vmatpush.msra.mxu0 %v262
      %314 = vmatpush.msra.mxu0 %v261
      %315 = vmatpush.msra.mxu0 %v260
      %316 = vmatpush.msra.mxu0 %v259
      %317 = vmatpush.msra.mxu0 %v258
      %318 = vmatpush.msra.mxu0 %v257
      %319 = vmatpush.msra.mxu0 %v256
      %320 = vmatpush.msra.mxu0 %v255
      %321 = vmatmul.f32.gmra.mxu0 %v303
      %v322 = vpop.f32.mrf.mxu0
      %v323 = vadd.f32 %v301, %v322
      %324 = vdwg.mxu0
      %s325 = scalar_lea.vmem %s1, 144
      %v326 = vld [vmem:[%s325] sm:$0xff]
      %v327 = vld [vmem:[%s325 + $0x8] sm:$0xff]
      %v328 = vld [vmem:[%s325 + $0x10] sm:$0xff]
      %v329 = vld [vmem:[%s325 + $0x18] sm:$0xff]
      %v330 = vld [vmem:[%s325 + $0x20] sm:$0xff]
      %v331 = vld [vmem:[%s325 + $0x28] sm:$0xff]
      %v332 = vld [vmem:[%s325 + $0x30] sm:$0xff]
      %v333 = vld [vmem:[%s325 + $0x38] sm:$0xff]
      %v334 = vld [vmem:[%s325 + $0x40] sm:$0xff]
      %vm335 = vcmask 1045504
      %v336 = vrot.slane %v253, 2
      %v337 = vrot.slane %v254, 2
      %v338 = vsel %vm335, %v336, %v337
      %v339 = vsel %vm280, %v338, 0
      %341 = vmatpush.msra.mxu0 0.0
      %342 = vmatpush.msra.mxu0 0.0
      %343 = vmatpush.msra.mxu0 0.0
      %344 = vmatpush.msra.mxu0 0.0
      %345 = vmatpush.msra.mxu0 0.0
      %346 = vmatpush.msra.mxu0 0.0
      %347 = vmatpush.msra.mxu0 0.0
      %348 = vmatpush.msra.mxu0 %v334
      %349 = vmatpush.msra.mxu0 %v333
      %350 = vmatpush.msra.mxu0 %v332
      %351 = vmatpush.msra.mxu0 %v331
      %352 = vmatpush.msra.mxu0 %v330
      %353 = vmatpush.msra.mxu0 %v329
      %354 = vmatpush.msra.mxu0 %v328
      %355 = vmatpush.msra.mxu0 %v327
      %356 = vmatpush.msra.mxu0 %v326
      %357 = vmatmul.f32.gmra.mxu0 %v339
      %v358 = vpop.f32.mrf.mxu0
      %v359 = vadd.f32 0.0, %v358
      %360 = vdwg.mxu0
      %v361 = vadd.f32 %v323, %v359
      %v362 = vld [vmem:[%s2] sm:$0x1]
      %v364 = vperm.slane %v362, 0
      %v366 = vadd.f32 %v361, %v364
      %367 = vst [vmem:[%s244] sm:$0xff] %v366
      %v368 = vrot.slane %v366, 4
      %v369 = vadd.f32 %v366, %v368
      %v370 = vrot.slane %v369, 2
      %v371 = vadd.f32 %v369, %v370
      %v372 = vrot.slane %v371, 1
      %v373 = vadd.f32 %v371, %v372
      %v374 = vmul.f32 %v366, %v366
      %v375 = vrot.slane %v374, 4
      %v376 = vadd.f32 %v374, %v375
      %v377 = vrot.slane %v376, 2
      %v378 = vadd.f32 %v376, %v377
      %v379 = vrot.slane %v378, 1
      %v380 = vadd.f32 %v378, %v379
      %vm381 = vcmask 1040384
      %v382 = vsel %vm381, %v373, %v380
      %383 = vst [vmem:[%s252] sm:$0x3] %v382
      %p384 = scmp.lt.s32.totalorder %s20, 1
      %s385 = scalar_select %p384, %s20, 1
      %p386 = scmp.lt.s32.totalorder %s21, 1
      %s387 = scalar_select %p386, %s21, 1
      %s388 = smul.addr %s385, 2
      %s389 = sadd.s32 %s387, %s388
      %s390 = smul.addr %s389, 8
      %s391 = scalar_lea.vmem %s3, %s390
      %p392 = scmp.lt.s32.totalorder %s20, 1
      %s393 = scalar_select %p392, %s20, 1
      %p394 = scmp.lt.s32.totalorder %s21, 1
      %s395 = scalar_select %p394, %s21, 1
      %s396 = smul.addr %s393, 2
      %s397 = sadd.s32 %s395, %s396
      %s398 = smul.addr %s397, 2
      %s399 = scalar_lea.vmem %s4, %s398
      // Predicated region
      $region33: #{double_conv.3} parent=31 // pred_check
        %p400 = pneg %p118
      $region34: #{double_conv.3} parent=31 // pred_check_branch
        %402 = sbr.rel (%p400) target = $region36
      $region35: #{double_conv.3} parent=31 // pred_region
        _
      $region36: #{double_conv.3} parent=31 // pred_fallthru
        _
      // Predicated region
      $region37: #{double_conv.3} parent=31 // pred_check
        %p403 = pneg %p146
      $region38: #{double_conv.3} parent=31 // pred_check_branch
        %405 = sbr.rel (%p403) target = $region40
      $region39: #{double_conv.3} parent=31 // pred_region
        _
      $region40: #{double_conv.3} parent=31 // pred_fallthru
        _
    $region32: #{double_conv.3} parent=5 // pred_fallthru
      _
    %p406 = scmp.le.s32.totalorder 2, %s11
    // Predicated region
    $region41: #{double_conv.3} parent=5 // pred_check
      %p407 = pneg %p406
    $region42: #{double_conv.3} parent=5 // pred_check_branch
      %409 = sbr.rel (%p407) target = $region44
    $region43: #{double_conv.3} parent=5 // pred_region
      %s410 = ssub.s32 %s11, 2
      // Predicated region
      $region45: #{double_conv.3} parent=43 // pred_check
        %p411 = pneg %p124
      $region46: #{double_conv.3} parent=43 // pred_check_branch
        %413 = sbr.rel (%p411) target = $region48
      $region47: #{double_conv.3} parent=43 // pred_region
        %p414 = scmp.lt.s32.totalorder %s22, 1
        %s415 = scalar_select %p414, %s22, 1
        %p416 = scmp.lt.s32.totalorder %s23, 1
        %s417 = scalar_select %p416, %s23, 1
        %s418 = smul.addr %s415, 2
        %s419 = sadd.s32 %s417, %s418
        %s420 = smul.addr %s419, 8
        %s421 = scalar_lea.vmem %s3, %s420
      $region48: #{double_conv.3} parent=43 // pred_fallthru
        _
      // Predicated region
      $region49: #{double_conv.3} parent=43 // pred_check
        %p422 = pneg %p152
      $region50: #{double_conv.3} parent=43 // pred_check_branch
        %424 = sbr.rel (%p422) target = $region52
      $region51: #{double_conv.3} parent=43 // pred_region
        %p425 = scmp.lt.s32.totalorder %s22, 1
        %s426 = scalar_select %p425, %s22, 1
        %p427 = scmp.lt.s32.totalorder %s23, 1
        %s428 = scalar_select %p427, %s23, 1
        %s429 = smul.addr %s426, 2
        %s430 = sadd.s32 %s428, %s429
        %s431 = smul.addr %s430, 2
        %s432 = scalar_lea.vmem %s4, %s431
      $region52: #{double_conv.3} parent=43 // pred_fallthru
        _
    $region44: #{double_conv.3} parent=5 // pred_fallthru
      _
  $region6: #{double_conv.3} parent=0 // loop_footer
    %s15 = sadd.s32 1, %s11
  $region7: #{double_conv.3} parent=0 // loop_footer_branch
    %10 = sbr.rel target = $region3
  $region8: #{double_conv.3} parent=0 // loop_exit
    _

// kernel: tile.43
$region0: #{tile.43}
  #allocation0 [shape = 's32[1]{0}', space=sflag, size = 0x4, scoped, tag = 'scoped memory for tile.43']
  %s0 = inlined_call_operand.vmem [shape: f32[8], index: 0, kind: input, shape index: {}]
  %s1 = inlined_call_operand.vmem [shape: f32[18,8], index: 1, kind: output, shape index: {}]
  // Predicated region
  $region2: #{tile.43} parent=0 // pred_check
    _
  $region3: #{tile.43} parent=0 // pred_check_branch
    %3 = sbr.rel (0) target = $region5
  $region4: #{tile.43} parent=0 // pred_region
    _
  $region5: #{tile.43} parent=0 // pred_fallthru
    _
  %v4 = vld [vmem:[%s0] ss:$0 sm:$0xff]
  %5 = vst [vmem:[%s1] sm:$0xff] %v4
  %s6 = scalar_lea.vmem %s1, 8
  %7 = vst [vmem:[%s6] sm:$0xff] %v4
  %s8 = scalar_lea.vmem %s1, 16
  %9 = vst [vmem:[%s8] sm:$0xff] %v4

// kernel: tile.44
$region0: #{tile.44}
  %s0 = inlined_call_operand.vmem [shape: f32[18,8], index: 0, kind: input, shape index: {}]
  %s1 = inlined_call_operand.vmem [shape: f32[1,144], index: 1, kind: output, shape index: {}]
  $region1: #{tile.44} parent=0
    #allocation0 [shape = 'u8[8192]{0}', space=vmem, size = 0x2000, scoped, tag = 'scoped mem for output reshape']
    %s2 = smov 3
    %v3 = vld [vmem:[%s0] ss:$16 sm:%s2]
    %vm4 = vcmask 64512
    %5 = vst.msk [vmem:[#allocation0] ss:$8 sm:$0x3] %vm4, %v3
    %s6 = scalar_lea.vmem %s0, 15
    %v7 = vld [vmem:[%s6] sm:$0x1]
    %8 = vrot.lane.b32.xlu0 %v7, 120
    %v9 = vpop.permute.xlu0 %8
    %vm10 = vcmask 1048512
    %11 = vst.msk [vmem:[#allocation0] sm:$0x1] %vm10, %v9
    %s12 = scalar_lea.vmem %s0, 14
    %v13 = vld [vmem:[%s12] sm:$0x1]
    %14 = vrot.lane.b32.xlu0 %v13, 112
    %v15 = vpop.permute.xlu0 %14
    %vm16 = vcmask 982912
    %17 = vst.msk [vmem:[#allocation0] sm:$0x1] %vm16, %v15
    %s18 = scalar_lea.vmem %s0, 13
    %v19 = vld [vmem:[%s18] sm:$0x1]
    %20 = vrot.lane.b32.xlu0 %v19, 104
    %v21 = vpop.permute.xlu0 %20
    %vm22 = vcmask 917312
    %23 = vst.msk [vmem:[#allocation0] sm:$0x1] %vm22, %v21
    %s24 = scalar_lea.vmem %s0, 12
    %v25 = vld [vmem:[%s24] sm:$0x1]
    %26 = vrot.lane.b32.xlu0 %v25, 96
    %v27 = vpop.permute.xlu0 %26
    %vm28 = vcmask 851712
    %29 = vst.msk [vmem:[#allocation0] sm:$0x1] %vm28, %v27
    %s30 = scalar_lea.vmem %s0, 11
    %v31 = vld [vmem:[%s30] sm:$0x1]
    %32 = vrot.lane.b32.xlu0 %v31, 88
    %v33 = vpop.permute.xlu0 %32
    %vm34 = vcmask 786112
    %35 = vst.msk [vmem:[#allocation0] sm:$0x1] %vm34, %v33
    %s36 = scalar_lea.vmem %s0, 10
    %v37 = vld [vmem:[%s36] sm:$0x1]
    %38 = vrot.lane.b32.xlu0 %v37, 80
    %v39 = vpop.permute.xlu0 %38
    %vm40 = vcmask 720512
    %41 = vst.msk [vmem:[#allocation0] sm:$0x1] %vm40, %v39
    %s42 = scalar_lea.vmem %s0, 9
    %v43 = vld [vmem:[%s42] sm:$0x1]
    %44 = vrot.lane.b32.xlu0 %v43, 72
    %v45 = vpop.permute.xlu0 %44
    %vm46 = vcmask 654912
    %47 = vst.msk [vmem:[#allocation0] sm:$0x1] %vm46, %v45
    %s48 = scalar_lea.vmem %s0, 8
    %v49 = vld [vmem:[%s48] sm:$0x1]
    %50 = vrot.lane.b32.xlu0 %v49, 64
    %v51 = vpop.permute.xlu0 %50
    %vm52 = vcmask 589312
    %53 = vst.msk [vmem:[#allocation0] sm:$0x1] %vm52, %v51
    %s54 = scalar_lea.vmem %s0, 7
    %v55 = vld [vmem:[%s54] sm:$0x1]
    %56 = vrot.lane.b32.xlu0 %v55, 56
    %v57 = vpop.permute.xlu0 %56
    %vm58 = vcmask 523712
    %59 = vst.msk [vmem:[#allocation0] sm:$0x1] %vm58, %v57
    %s60 = scalar_lea.vmem %s0, 6
    %v61 = vld [vmem:[%s60] sm:$0x1]
    %62 = vrot.lane.b32.xlu0 %v61, 48
    %v63 = vpop.permute.xlu0 %62
    %vm64 = vcmask 458112
    %65 = vst.msk [vmem:[#allocation0] sm:$0x1] %vm64, %v63
    %s66 = scalar_lea.vmem %s0, 5
    %v67 = vld [vmem:[%s66] sm:$0x1]
    %68 = vrot.lane.b32.xlu0 %v67, 40
    %v69 = vpop.permute.xlu0 %68
    %vm70 = vcmask 392512
    %71 = vst.msk [vmem:[#allocation0] sm:$0x1] %vm70, %v69
    %s72 = scalar_lea.vmem %s0, 4
    %v73 = vld [vmem:[%s72] sm:$0x1]
    %74 = vrot.lane.b32.xlu0 %v73, 32
    %v75 = vpop.permute.xlu0 %74
    %vm76 = vcmask 326912
    %77 = vst.msk [vmem:[#allocation0] sm:$0x1] %vm76, %v75
    %s78 = scalar_lea.vmem %s0, 3
    %v79 = vld [vmem:[%s78] sm:$0x1]
    %80 = vrot.lane.b32.xlu0 %v79, 24
    %v81 = vpop.permute.xlu0 %80
    %vm82 = vcmask 261312
    %83 = vst.msk [vmem:[#allocation0] sm:$0x1] %vm82, %v81
    %s84 = scalar_lea.vmem %s0, 2
    %v85 = vld [vmem:[%s84] sm:$0x1]
    %86 = vrot.lane.b32.xlu0 %v85, 16
    %v87 = vpop.permute.xlu0 %86
    %vm88 = vcmask 195712
    %89 = vst.msk [vmem:[#allocation0] sm:$0x1] %vm88, %v87
    %s90 = scalar_lea.vmem %s0, 1
    %s91 = smov 3
    %v92 = vld [vmem:[%s90] ss:$16 sm:%s91]
    %93 = vrot.lane.b32.xlu0 %v92, 8
    %v94 = vpop.permute.xlu0 %93
    %vm95 = vcmask 130112
    %96 = vst.msk [vmem:[#allocation0] ss:$8 sm:$0x3] %vm95, %v94
    %s98 = ssub.s32 2, 1
    %v99 = vld [vmem:[#allocation0] sm:%s98]
    %s101 = ssub.s32 2, 1
    %102 = vst [vmem:[%s1] sm:%s101] %v99
    %s103 = scalar_lea.vmem [#allocation0], 8
    %v104 = vld [vmem:[%s103] sm:%s98]
    %s106 = ssub.s32 2, 1
    %s107 = scalar_lea.vmem %s1, 1
    %108 = vst [vmem:[%s107] sm:%s106] %v104

// kernel: double_conv.4
$region0: #{double_conv.4}
  #allocation0 [shape = 'u32[]', space=smem, size = 0x4, offset = 0x4, fixed_abs, tag = 'smem constant byte address 0x4 - core index']
  #allocation1 [shape = 'u32[72,128]{1,0:T(1,128)}', space=vmem, size = 0x9000, scoped, tag = 'internal scratch']
  %s0 = inlined_call_operand.vmem [shape: f32[2,2,10,144], index: 0, kind: input, shape index: {}]
  %s1 = inlined_call_operand.vmem [shape: f32[3,144,128], index: 1, kind: input, shape index: {}]
  %s2 = inlined_call_operand.vmem [shape: f32[1,128], index: 2, kind: input, shape index: {}]
  %s3 = inlined_call_operand.vmem [shape: f32[1,144], index: 3, kind: input, shape index: {}]
  %s4 = inlined_call_operand.vmem [shape: f32[1,144], index: 4, kind: input, shape index: {}]
  %s5 = inlined_call_operand.vmem [shape: f32[2,16,128], index: 5, kind: output, shape index: {0}]
  %s6 = inlined_call_operand.vmem [shape: f32[2,2,2,128], index: 6, kind: output, shape index: {1}]
  %7 = xla_tuple %s5, %s6
  %s8 = sld [smem:[#allocation0]]
  $region61: #{double_conv.4} parent=0
    _
  %s10 = ssub.s32 1, %s8
  %s11 = scalar_select 0, %s10, %s8
  loop: start=0, step=1, limit=6
  $region2: #{double_conv.4} parent=0 // loop_pre_header
    _
  $region3: #{double_conv.4} parent=0 // loop_header
    %s13 = sphi 0, %s17
    %p14 = scmp.ge.s32.totalorder %s13, 6
    %s20 = sphi 0, %s32
    %s21 = sphi 0, %s28
    %s22 = sphi 0, %s20
    %s23 = sphi 0, %s21
    %s24 = sphi 0, %s22
    %s25 = sphi 0, %s23
    %s37 = sphi 0, %s39
    %s40 = sphi 0, %s37
    %s41 = sphi 0, %s40
    %s57 = sphi 0, %s41
    %s61 = sphi 0, %s61
    %s63 = sphi 0, %s61
    %s64 = sphi 0, %s63
    %s78 = sphi 0, %s64
    %s82 = sphi 0, %s82
    %s84 = sphi 0, %s82
    %s85 = sphi 0, %s84
    %s99 = sphi 0, %s85
    %s103 = sphi 0, %s103
    %s105 = sphi 0, %s103
    %s106 = sphi 0, %s105
    %s120 = sphi 0, %s106
    %s124 = sphi 0, %s124
    %s126 = sphi 0, %s124
    %s127 = sphi 0, %s126
    %s141 = sphi 0, %s127
    %s149 = sphi 0, %s151
    %s152 = sphi 0, %s149
    %s153 = sphi 0, %s152
    %s169 = sphi 0, %s153
    %s177 = sphi 0, %s179
    %s180 = sphi 0, %s177
    %s181 = sphi 0, %s180
    %s197 = sphi 0, %s181
  $region4: #{double_conv.4} parent=0 // loop_header_branch
    %16 = sbr.rel (%p14) target = $region8
  $region5: #{double_conv.4} parent=0 // loop_body
    %s18 = ssub.s32 %s13, 1
    %s19 = ssub.s32 %s13, 2
    %s26 = sadd.s32 1, %s21
    %p27 = scmp.ge.s32.totalorder %s26, 2
    %s28 = scalar_select %p27, 0, %s26
    %s29 = sadd.s32 1, %s20
    %s30 = scalar_select %p27, %s29, %s20
    %p31 = scmp.ge.s32.totalorder %s30, 2
    %s32 = scalar_select %p31, 0, %s30
    %s33 = ssub.s32 %s20, %s32
    %s34 = ssub.s32 %s21, %s28
    %s35 = sor.u32 %s33, %s34
    %p36 = scmp.eq.s32.totalorder %s35, 0
    %s38 = sadd.s32 %s37, 1
    %s39 = scalar_select %p36, %s37, %s38
    %p42 = pneg %p36
    %p43 = scmp.eq.s32.totalorder %s13, 3
    %p44 = por %p42, %p43
    %p45 = scmp.ne.s32.totalorder %s37, %s40
    %p46 = scmp.eq.s32.totalorder %s13, 0
    %p47 = por %p45, %p46
    %p48 = scmp.ne.s32.totalorder %s37, %s40
    %p49 = scmp.eq.s32.totalorder %s18, 3
    %p50 = por %p48, %p49
    %p51 = scmp.ne.s32.totalorder %s40, %s41
    %p52 = scmp.eq.s32.totalorder %s18, 0
    %p53 = por %p51, %p52
    %p54 = scmp.ne.s32.totalorder %s40, %s41
    %p55 = scmp.eq.s32.totalorder %s19, 3
    %p56 = por %p54, %p55
    %p58 = scmp.ne.s32.totalorder %s41, %s57
    %p59 = scmp.eq.s32.totalorder %s19, 0
    %p60 = por %p58, %p59
    %s62 = sadd.s32 %s61, 1
    %p65 = scmp.eq.s32.totalorder %s13, 3
    %p66 = scmp.ne.s32.totalorder %s61, %s63
    %p67 = scmp.eq.s32.totalorder %s13, 0
    %p68 = por %p66, %p67
    %p69 = scmp.ne.s32.totalorder %s61, %s63
    %p70 = scmp.eq.s32.totalorder %s18, 3
    %p71 = por %p69, %p70
    %p72 = scmp.ne.s32.totalorder %s63, %s64
    %p73 = scmp.eq.s32.totalorder %s18, 0
    %p74 = por %p72, %p73
    %p75 = scmp.ne.s32.totalorder %s63, %s64
    %p76 = scmp.eq.s32.totalorder %s19, 3
    %p77 = por %p75, %p76
    %p79 = scmp.ne.s32.totalorder %s64, %s78
    %p80 = scmp.eq.s32.totalorder %s19, 0
    %p81 = por %p79, %p80
    %s83 = sadd.s32 %s82, 1
    %p86 = scmp.eq.s32.totalorder %s13, 3
    %p87 = scmp.ne.s32.totalorder %s82, %s84
    %p88 = scmp.eq.s32.totalorder %s13, 0
    %p89 = por %p87, %p88
    %p90 = scmp.ne.s32.totalorder %s82, %s84
    %p91 = scmp.eq.s32.totalorder %s18, 3
    %p92 = por %p90, %p91
    %p93 = scmp.ne.s32.totalorder %s84, %s85
    %p94 = scmp.eq.s32.totalorder %s18, 0
    %p95 = por %p93, %p94
    %p96 = scmp.ne.s32.totalorder %s84, %s85
    %p97 = scmp.eq.s32.totalorder %s19, 3
    %p98 = por %p96, %p97
    %p100 = scmp.ne.s32.totalorder %s85, %s99
    %p101 = scmp.eq.s32.totalorder %s19, 0
    %p102 = por %p100, %p101
    %s104 = sadd.s32 %s103, 1
    %p107 = scmp.eq.s32.totalorder %s13, 3
    %p108 = scmp.ne.s32.totalorder %s103, %s105
    %p109 = scmp.eq.s32.totalorder %s13, 0
    %p110 = por %p108, %p109
    %p111 = scmp.ne.s32.totalorder %s103, %s105
    %p112 = scmp.eq.s32.totalorder %s18, 3
    %p113 = por %p111, %p112
    %p114 = scmp.ne.s32.totalorder %s105, %s106
    %p115 = scmp.eq.s32.totalorder %s18, 0
    %p116 = por %p114, %p115
    %p117 = scmp.ne.s32.totalorder %s105, %s106
    %p118 = scmp.eq.s32.totalorder %s19, 3
    %p119 = por %p117, %p118
    %p121 = scmp.ne.s32.totalorder %s106, %s120
    %p122 = scmp.eq.s32.totalorder %s19, 0
    %p123 = por %p121, %p122
    %s125 = sadd.s32 %s124, 1
    %p128 = scmp.eq.s32.totalorder %s13, 3
    %p129 = scmp.ne.s32.totalorder %s124, %s126
    %p130 = scmp.eq.s32.totalorder %s13, 0
    %p131 = por %p129, %p130
    %p132 = scmp.ne.s32.totalorder %s124, %s126
    %p133 = scmp.eq.s32.totalorder %s18, 3
    %p134 = por %p132, %p133
    %p135 = scmp.ne.s32.totalorder %s126, %s127
    %p136 = scmp.eq.s32.totalorder %s18, 0
    %p137 = por %p135, %p136
    %p138 = scmp.ne.s32.totalorder %s126, %s127
    %p139 = scmp.eq.s32.totalorder %s19, 3
    %p140 = por %p138, %p139
    %p142 = scmp.ne.s32.totalorder %s127, %s141
    %p143 = scmp.eq.s32.totalorder %s19, 0
    %p144 = por %p142, %p143
    %s145 = ssub.s32 %s20, %s32
    %s146 = ssub.s32 %s21, %s28
    %s147 = sor.u32 %s145, %s146
    %p148 = scmp.eq.s32.totalorder %s147, 0
    %s150 = sadd.s32 %s149, 1
    %s151 = scalar_select %p148, %s149, %s150
    %p154 = pneg %p148
    %p155 = scmp.eq.s32.totalorder %s13, 3
    %p156 = por %p154, %p155
    %p157 = scmp.ne.s32.totalorder %s149, %s152
    %p158 = scmp.eq.s32.totalorder %s13, 0
    %p159 = por %p157, %p158
    %p160 = scmp.ne.s32.totalorder %s149, %s152
    %p161 = scmp.eq.s32.totalorder %s18, 3
    %p162 = por %p160, %p161
    %p163 = scmp.ne.s32.totalorder %s152, %s153
    %p164 = scmp.eq.s32.totalorder %s18, 0
    %p165 = por %p163, %p164
    %p166 = scmp.ne.s32.totalorder %s152, %s153
    %p167 = scmp.eq.s32.totalorder %s19, 3
    %p168 = por %p166, %p167
    %p170 = scmp.ne.s32.totalorder %s153, %s169
    %p171 = scmp.eq.s32.totalorder %s19, 0
    %p172 = por %p170, %p171
    %s173 = ssub.s32 %s20, %s32
    %s174 = ssub.s32 %s21, %s28
    %s175 = sor.u32 %s173, %s174
    %p176 = scmp.eq.s32.totalorder %s175, 0
    %s178 = sadd.s32 %s177, 1
    %s179 = scalar_select %p176, %s177, %s178
    %p182 = pneg %p176
    %p183 = scmp.eq.s32.totalorder %s13, 3
    %p184 = por %p182, %p183
    %p185 = scmp.ne.s32.totalorder %s177, %s180
    %p186 = scmp.eq.s32.totalorder %s13, 0
    %p187 = por %p185, %p186
    %p188 = scmp.ne.s32.totalorder %s177, %s180
    %p189 = scmp.eq.s32.totalorder %s18, 3
    %p190 = por %p188, %p189
    %p191 = scmp.ne.s32.totalorder %s180, %s181
    %p192 = scmp.eq.s32.totalorder %s18, 0
    %p193 = por %p191, %p192
    %p194 = scmp.ne.s32.totalorder %s180, %s181
    %p195 = scmp.eq.s32.totalorder %s19, 3
    %p196 = por %p194, %p195
    %p198 = scmp.ne.s32.totalorder %s181, %s197
    %p199 = scmp.eq.s32.totalorder %s19, 0
    %p200 = por %p198, %p199
    %p201 = scmp.le.s32.totalorder 1, %s13
    %p202 = scmp.lt.s32.totalorder %s13, 5
    %p203 = pnand %p201, %p202
    %p204 = pneg %p203
    // Predicated region
    $region9: #{double_conv.4} parent=5 // pred_check
      _
    $region10: #{double_conv.4} parent=5 // pred_check_branch
      %206 = sbr.rel (%p203) target = $region12
    $region11: #{double_conv.4} parent=5 // pred_region
      %s207 = ssub.s32 %s13, 1
      // Predicated region
      $region13: #{double_conv.4} parent=11 // pred_check
        %p208 = pneg %p74
      $region14: #{double_conv.4} parent=11 // pred_check_branch
        %210 = sbr.rel (%p208) target = $region16
      $region15: #{double_conv.4} parent=11 // pred_region
        _
      $region16: #{double_conv.4} parent=11 // pred_fallthru
        _
      // Predicated region
      $region17: #{double_conv.4} parent=11 // pred_check
        %p211 = pneg %p95
      $region18: #{double_conv.4} parent=11 // pred_check_branch
        %213 = sbr.rel (%p211) target = $region20
      $region19: #{double_conv.4} parent=11 // pred_region
        _
      $region20: #{double_conv.4} parent=11 // pred_fallthru
        _
      // Predicated region
      $region21: #{double_conv.4} parent=11 // pred_check
        %p214 = pneg %p116
      $region22: #{double_conv.4} parent=11 // pred_check_branch
        %216 = sbr.rel (%p214) target = $region24
      $region23: #{double_conv.4} parent=11 // pred_region
        _
      $region24: #{double_conv.4} parent=11 // pred_fallthru
        _
      // Predicated region
      $region25: #{double_conv.4} parent=11 // pred_check
        %p217 = pneg %p137
      $region26: #{double_conv.4} parent=11 // pred_check_branch
        %219 = sbr.rel (%p217) target = $region28
      $region27: #{double_conv.4} parent=11 // pred_region
        _
      $region28: #{double_conv.4} parent=11 // pred_fallthru
        _
    $region12: #{double_conv.4} parent=5 // pred_fallthru
      _
    %p220 = scmp.lt.s32.totalorder %s13, 4
    // Predicated region
    $region29: #{double_conv.4} parent=5 // pred_check
      %p221 = pneg %p220
    $region30: #{double_conv.4} parent=5 // pred_check_branch
      %223 = sbr.rel (%p221) target = $region32
    $region31: #{double_conv.4} parent=5 // pred_region
      // Predicated region
      $region33: #{double_conv.4} parent=31 // pred_check
        %p224 = pneg %p47
      $region34: #{double_conv.4} parent=31 // pred_check_branch
        %226 = sbr.rel (%p224) target = $region36
      $region35: #{double_conv.4} parent=31 // pred_region
        %p227 = scmp.lt.s32.totalorder %s20, 1
        %s228 = scalar_select %p227, %s20, 1
        %p229 = scmp.lt.s32.totalorder %s21, 1
        %s230 = scalar_select %p229, %s21, 1
        %s231 = smul.addr %s230, 4
        %s232 = smul.addr %s228, 8
        %s233 = sadd.s32 %s231, %s232
        %s234 = smul.addr %s233, 8
        %s235 = scalar_lea.vmem %s0, %s234
      $region36: #{double_conv.4} parent=31 // pred_fallthru
        _
    $region32: #{double_conv.4} parent=5 // pred_fallthru
      _
    %p236 = scmp.le.s32.totalorder 1, %s13
    %p237 = scmp.lt.s32.totalorder %s13, 5
    %p238 = pnand %p236, %p237
    %p239 = pneg %p238
    // Predicated region
    $region37: #{double_conv.4} parent=5 // pred_check
      _
    $region38: #{double_conv.4} parent=5 // pred_check_branch
      %241 = sbr.rel (%p238) target = $region40
    $region39: #{double_conv.4} parent=5 // pred_region
      %s242 = ssub.s32 %s13, 1
      %p243 = scmp.lt.s32.totalorder %s22, 1
      %s244 = scalar_select %p243, %s22, 1
      %p245 = scmp.lt.s32.totalorder %s23, 1
      %s246 = scalar_select %p245, %s23, 1
      %s247 = smul.addr %s246, 4
      %s248 = smul.addr %s244, 8
      %s249 = sadd.s32 %s247, %s248
      %s250 = smul.addr %s249, 8
      %s251 = scalar_lea.vmem %s0, %s250
      %p252 = pneg %p53
      %p253 = pneg %p50
      %p254 = pneg %p74
      %p255 = pneg %p71
      %p256 = pneg %p95
      %p257 = pneg %p92
      %p258 = pneg %p116
      %p259 = pneg %p113
      %p260 = pneg %p137
      %p261 = pneg %p134
      %p262 = pneg %p165
      %p263 = pneg %p162
      %p264 = scmp.lt.s32.totalorder %s22, 1
      %s265 = scalar_select %p264, %s22, 1
      %p266 = scmp.lt.s32.totalorder %s23, 1
      %s267 = scalar_select %p266, %s23, 1
      %s268 = smul.addr %s265, 2
      %s269 = sadd.s32 %s267, %s268
      %s270 = smul.addr %s269, 8
      %s271 = scalar_lea.vmem %s5, %s270
      %p272 = pneg %p193
      %p273 = pneg %p190
      %p274 = scmp.lt.s32.totalorder %s22, 1
      %s275 = scalar_select %p274, %s22, 1
      %p276 = scmp.lt.s32.totalorder %s23, 1
      %s277 = scalar_select %p276, %s23, 1
      %s278 = smul.addr %s275, 2
      %s279 = sadd.s32 %s277, %s278
      %s280 = smul.addr %s279, 2
      %s281 = scalar_lea.vmem %s6, %s280
      %p282 = scmp.lt.s32.totalorder %s22, 1
      %s283 = scalar_select %p282, %s22, 1
      %p284 = scmp.lt.s32.totalorder %s23, 1
      %s285 = scalar_select %p284, %s23, 1
      %s286 = smul.addr %s285, 4
      %s287 = smul.addr %s283, 8
      %s288 = sadd.s32 %s286, %s287
      %s289 = smul.addr %s288, 8
      %s290 = scalar_lea.vmem %s0, %s289
      %p291 = scmp.lt.s32.totalorder %s22, 1
      %s292 = scalar_select %p291, %s22, 1
      %p293 = scmp.lt.s32.totalorder %s23, 1
      %s294 = scalar_select %p293, %s23, 1
      %s295 = smul.addr %s292, 2
      %s296 = sadd.s32 %s294, %s295
      %s297 = smul.addr %s296, 8
      %s298 = scalar_lea.vmem %s5, %s297
      %p299 = scmp.lt.s32.totalorder %s22, 1
      %s300 = scalar_select %p299, %s22, 1
      %p301 = scmp.lt.s32.totalorder %s23, 1
      %s302 = scalar_select %p301, %s23, 1
      %s303 = smul.addr %s300, 2
      %s304 = sadd.s32 %s302, %s303
      %s305 = smul.addr %s304, 2
      %s306 = scalar_lea.vmem %s6, %s305
      %v307 = vld [vmem:[%s290] sm:$0xff]
      %v308 = vld [vmem:[%s290 + $0x8] sm:$0xff]
      %v309 = vld [vmem:[%s290 + $0x10] sm:$0x3]
      %v310 = vld [vmem:[%s290 + $0x18] sm:$0x3]
      %v311 = vld [vmem:[%s3] sm:$0x3]
      %v313 = vperm.slane %v311, 0
      %v314 = vperm.slane %v311, 1
      %v317 = vmul.f32 %v307, %v313
      %v318 = vmul.f32 %v308, %v314
      %v319 = vmul.f32 %v309, %v313
      %v320 = vmul.f32 %v310, %v314
      %v321 = vld [vmem:[%s4] sm:$0x3]
      %v323 = vperm.slane %v321, 0
      %v324 = vperm.slane %v321, 1
      %v327 = vadd.f32 %v317, %v323
      %v328 = vadd.f32 %v318, %v324
      %v329 = vadd.f32 %v319, %v323
      %v330 = vadd.f32 %v320, %v324
      %v331 = vmax.f32 %v327, 0.0
      %v332 = vmax.f32 %v328, 0.0
      %v333 = vmax.f32 %v329, 0.0
      %v334 = vmax.f32 %v330, 0.0
      %v335 = vlaneseq
      %v336 = vand.u32 %v335, 127
      %v337 = vadd.s32 %v336, 128
      %vm338 = vcmp.ge.s32.totalorder %v336, 8
      %vm339 = vcmp.ge.s32.totalorder %v337, 8
      %vm340 = vcmp.lt.s32.totalorder %v336, 136
      %vm341 = vcmp.lt.s32.totalorder %v337, 136
      %vm342 = vmand %vm338, %vm340
      %vm343 = vmand %vm339, %vm341
      %v344 = vlaneseq
      %v345 = vshrl.u32 %v344, 7
      %v346 = vadd.s32 %v345, 8
      %vm347 = vcmp.eq.s32.totalorder %v345, 0
      %vm348 = vcmp.eq.s32.totalorder %v346, 0
      %p349 = scmp.eq.s32.totalorder %s23, 0
      %s350 = scalar_select %p349, 1, 0
      %v351 = vstv %s350
      %vm352 = vcmp.eq.s32.totalorder %v351, 1
      %vm353 = vmand %vm347, %vm352
      %vm354 = vmand %vm348, %vm352
      %vm355 = vcmp.eq.s32.totalorder %v345, 9
      %vm356 = vcmp.eq.s32.totalorder %v346, 9
      %p357 = scmp.eq.s32.totalorder %s23, 1
      %s358 = scalar_select %p357, 1, 0
      %v359 = vstv %s358
      %vm360 = vcmp.eq.s32.totalorder %v359, 1
      %vm361 = vmand %vm355, %vm360
      %vm362 = vmand %vm356, %vm360
      %vm363 = vmor %vm353, %vm361
      %vm364 = vmor %vm354, %vm362
      %vm365 = vmxor %vm363, 1
      %vm366 = vmxor %vm364, 1
      %v367 = vsel %vm342, 1, 0
      %v368 = vsel %vm343, 1, 0
      %vm369 = vcmp.eq.s32.totalorder %v367, 1
      %vm370 = vcmp.eq.s32.totalorder %v368, 1
      %v371 = vsel %vm365, 1, 0
      %v372 = vsel %vm366, 1, 0
      %vm373 = vcmp.eq.s32.totalorder %v371, 1
      %vm374 = vcmp.eq.s32.totalorder %v372, 1
      %vm375 = vmand %vm369, %vm373
      %vm376 = vmand %vm370, %vm373
      %vm377 = vmand %vm369, %vm374
      %vm378 = vmand %vm370, %vm374
      %v379 = vsel %vm375, %v331, 0.0
      %v380 = vsel %vm376, %v332, 0.0
      %v381 = vsel %vm377, %v333, 0.0
      %v382 = vsel %vm378, %v334, 0.0
      %v383 = vld [vmem:[%s1] sm:$0xff]
      %v384 = vld [vmem:[%s1 + $0x8] sm:$0xff]
      %v385 = vld [vmem:[%s1 + $0x10] sm:$0xff]
      %v386 = vld [vmem:[%s1 + $0x18] sm:$0xff]
      %v387 = vld [vmem:[%s1 + $0x20] sm:$0xff]
      %v388 = vld [vmem:[%s1 + $0x28] sm:$0xff]
      %v389 = vld [vmem:[%s1 + $0x30] sm:$0xff]
      %v390 = vld [vmem:[%s1 + $0x38] sm:$0xff]
      %v391 = vld [vmem:[%s1 + $0x40] sm:$0xff]
      %v392 = vld [vmem:[%s1 + $0x48] sm:$0xff]
      %v393 = vld [vmem:[%s1 + $0x50] sm:$0xff]
      %v394 = vld [vmem:[%s1 + $0x58] sm:$0xff]
      %v395 = vld [vmem:[%s1 + $0x60] sm:$0xff]
      %v396 = vld [vmem:[%s1 + $0x68] sm:$0xff]
      %v397 = vld [vmem:[%s1 + $0x70] sm:$0xff]
      %v398 = vld [vmem:[%s1 + $0x78] sm:$0xff]
      %v399 = vld [vmem:[%s1 + $0x80] sm:$0xff]
      %v400 = vld [vmem:[%s1 + $0x88] sm:$0xff]
      %s401 = scalar_lea.vmem %s1, 144
      %v402 = vld [vmem:[%s401] sm:$0xff]
      %v403 = vld [vmem:[%s401 + $0x8] sm:$0xff]
      %v404 = vld [vmem:[%s401 + $0x10] sm:$0xff]
      %v405 = vld [vmem:[%s401 + $0x18] sm:$0xff]
      %v406 = vld [vmem:[%s401 + $0x20] sm:$0xff]
      %v407 = vld [vmem:[%s401 + $0x28] sm:$0xff]
      %v408 = vld [vmem:[%s401 + $0x30] sm:$0xff]
      %v409 = vld [vmem:[%s401 + $0x38] sm:$0xff]
      %v410 = vld [vmem:[%s401 + $0x40] sm:$0xff]
      %v411 = vld [vmem:[%s401 + $0x48] sm:$0xff]
      %v412 = vld [vmem:[%s401 + $0x50] sm:$0xff]
      %v413 = vld [vmem:[%s401 + $0x58] sm:$0xff]
      %v414 = vld [vmem:[%s401 + $0x60] sm:$0xff]
      %v415 = vld [vmem:[%s401 + $0x68] sm:$0xff]
      %v416 = vld [vmem:[%s401 + $0x70] sm:$0xff]
      %v417 = vld [vmem:[%s401 + $0x78] sm:$0xff]
      %v418 = vld [vmem:[%s401 + $0x80] sm:$0xff]
      %v419 = vld [vmem:[%s401 + $0x88] sm:$0xff]
      %vm424 = vcmask 1046528
      %v425 = vrot.slane %v379, 1
      %v426 = vrot.slane %v381, 1
      %v427 = vsel %vm424, %v425, %v426
      %v428 = vrot.slane %v380, 1
      %v429 = vrot.slane %v382, 1
      %v430 = vsel %vm424, %v428, %v429
      %vm432 = vcmask 130048
      %v433 = vsel %vm432, %v430, 0
      %435 = vmatpush.msra.mxu0 %v417
      %436 = vmatpush.msra.mxu0 %v416
      %437 = vmatpush.msra.mxu0 %v415
      %438 = vmatpush.msra.mxu0 %v414
      %439 = vmatpush.msra.mxu0 %v413
      %440 = vmatpush.msra.mxu0 %v412
      %441 = vmatpush.msra.mxu0 %v411
      %442 = vmatpush.msra.mxu0 %v410
      %443 = vmatpush.msra.mxu0 %v409
      %444 = vmatpush.msra.mxu0 %v408
      %445 = vmatpush.msra.mxu0 %v407
      %446 = vmatpush.msra.mxu0 %v406
      %447 = vmatpush.msra.mxu0 %v405
      %448 = vmatpush.msra.mxu0 %v404
      %449 = vmatpush.msra.mxu0 %v403
      %450 = vmatpush.msra.mxu0 %v402
      %451 = vmatmul.f32.gmra.mxu0 %v427
      %v452 = vpop.f32.mrf.mxu0
      %v453 = vadd.f32 0.0, %v452
      %454 = vdwg.mxu0
      %455 = vmatpush.msra.mxu0 0.0
      %456 = vmatpush.msra.mxu0 0.0
      %457 = vmatpush.msra.mxu0 0.0
      %458 = vmatpush.msra.mxu0 0.0
      %459 = vmatpush.msra.mxu0 0.0
      %460 = vmatpush.msra.mxu0 0.0
      %461 = vmatpush.msra.mxu0 0.0
      %462 = vmatpush.msra.mxu0 0.0
      %463 = vmatpush.msra.mxu0 0.0
      %464 = vmatpush.msra.mxu0 0.0
      %465 = vmatpush.msra.mxu0 0.0
      %466 = vmatpush.msra.mxu0 0.0
      %467 = vmatpush.msra.mxu0 0.0
      %468 = vmatpush.msra.mxu0 0.0
      %469 = vmatpush.msra.mxu0 %v419
      %470 = vmatpush.msra.mxu0 %v418
      %471 = vmatmul.f32.gmra.mxu0 %v433
      %v472 = vpop.f32.mrf.mxu0
      %v473 = vadd.f32 %v453, %v472
      %474 = vdwg.mxu0
      %v475 = vsel %vm432, %v380, 0
      %477 = vmatpush.msra.mxu0 %v398
      %478 = vmatpush.msra.mxu0 %v397
      %479 = vmatpush.msra.mxu0 %v396
      %480 = vmatpush.msra.mxu0 %v395
      %481 = vmatpush.msra.mxu0 %v394
      %482 = vmatpush.msra.mxu0 %v393
      %483 = vmatpush.msra.mxu0 %v392
      %484 = vmatpush.msra.mxu0 %v391
      %485 = vmatpush.msra.mxu0 %v390
      %486 = vmatpush.msra.mxu0 %v389
      %487 = vmatpush.msra.mxu0 %v388
      %488 = vmatpush.msra.mxu0 %v387
      %489 = vmatpush.msra.mxu0 %v386
      %490 = vmatpush.msra.mxu0 %v385
      %491 = vmatpush.msra.mxu0 %v384
      %492 = vmatpush.msra.mxu0 %v383
      %493 = vmatmul.f32.gmra.mxu0 %v379
      %v494 = vpop.f32.mrf.mxu0
      %v495 = vadd.f32 %v473, %v494
      %496 = vdwg.mxu0
      %497 = vmatpush.msra.mxu0 0.0
      %498 = vmatpush.msra.mxu0 0.0
      %499 = vmatpush.msra.mxu0 0.0
      %500 = vmatpush.msra.mxu0 0.0
      %501 = vmatpush.msra.mxu0 0.0
      %502 = vmatpush.msra.mxu0 0.0
      %503 = vmatpush.msra.mxu0 0.0
      %504 = vmatpush.msra.mxu0 0.0
      %505 = vmatpush.msra.mxu0 0.0
      %506 = vmatpush.msra.mxu0 0.0
      %507 = vmatpush.msra.mxu0 0.0
      %508 = vmatpush.msra.mxu0 0.0
      %509 = vmatpush.msra.mxu0 0.0
      %510 = vmatpush.msra.mxu0 0.0
      %511 = vmatpush.msra.mxu0 %v400
      %512 = vmatpush.msra.mxu0 %v399
      %513 = vmatmul.f32.gmra.mxu0 %v475
      %v514 = vpop.f32.mrf.mxu0
      %v515 = vadd.f32 %v495, %v514
      %516 = vdwg.mxu0
      %s517 = scalar_lea.vmem %s1, 288
      %v518 = vld [vmem:[%s517] sm:$0xff]
      %v519 = vld [vmem:[%s517 + $0x8] sm:$0xff]
      %v520 = vld [vmem:[%s517 + $0x10] sm:$0xff]
      %v521 = vld [vmem:[%s517 + $0x18] sm:$0xff]
      %v522 = vld [vmem:[%s517 + $0x20] sm:$0xff]
      %v523 = vld [vmem:[%s517 + $0x28] sm:$0xff]
      %v524 = vld [vmem:[%s517 + $0x30] sm:$0xff]
      %v525 = vld [vmem:[%s517 + $0x38] sm:$0xff]
      %v526 = vld [vmem:[%s517 + $0x40] sm:$0xff]
      %v527 = vld [vmem:[%s517 + $0x48] sm:$0xff]
      %v528 = vld [vmem:[%s517 + $0x50] sm:$0xff]
      %v529 = vld [vmem:[%s517 + $0x58] sm:$0xff]
      %v530 = vld [vmem:[%s517 + $0x60] sm:$0xff]
      %v531 = vld [vmem:[%s517 + $0x68] sm:$0xff]
      %v532 = vld [vmem:[%s517 + $0x70] sm:$0xff]
      %v533 = vld [vmem:[%s517 + $0x78] sm:$0xff]
      %v534 = vld [vmem:[%s517 + $0x80] sm:$0xff]
      %v535 = vld [vmem:[%s517 + $0x88] sm:$0xff]
      %vm536 = vcmask 1045504
      %v537 = vrot.slane %v379, 2
      %v538 = vrot.slane %v381, 2
      %v539 = vsel %vm536, %v537, %v538
      %v540 = vrot.slane %v380, 2
      %v541 = vrot.slane %v382, 2
      %v542 = vsel %vm536, %v540, %v541
      %v544 = vsel %vm432, %v542, 0
      %546 = vmatpush.msra.mxu0 %v533
      %547 = vmatpush.msra.mxu0 %v532
      %548 = vmatpush.msra.mxu0 %v531
      %549 = vmatpush.msra.mxu0 %v530
      %550 = vmatpush.msra.mxu0 %v529
      %551 = vmatpush.msra.mxu0 %v528
      %552 = vmatpush.msra.mxu0 %v527
      %553 = vmatpush.msra.mxu0 %v526
      %554 = vmatpush.msra.mxu0 %v525
      %555 = vmatpush.msra.mxu0 %v524
      %556 = vmatpush.msra.mxu0 %v523
      %557 = vmatpush.msra.mxu0 %v522
      %558 = vmatpush.msra.mxu0 %v521
      %559 = vmatpush.msra.mxu0 %v520
      %560 = vmatpush.msra.mxu0 %v519
      %561 = vmatpush.msra.mxu0 %v518
      %562 = vmatmul.f32.gmra.mxu0 %v539
      %v563 = vpop.f32.mrf.mxu0
      %v564 = vadd.f32 0.0, %v563
      %565 = vdwg.mxu0
      %566 = vmatpush.msra.mxu0 0.0
      %567 = vmatpush.msra.mxu0 0.0
      %568 = vmatpush.msra.mxu0 0.0
      %569 = vmatpush.msra.mxu0 0.0
      %570 = vmatpush.msra.mxu0 0.0
      %571 = vmatpush.msra.mxu0 0.0
      %572 = vmatpush.msra.mxu0 0.0
      %573 = vmatpush.msra.mxu0 0.0
      %574 = vmatpush.msra.mxu0 0.0
      %575 = vmatpush.msra.mxu0 0.0
      %576 = vmatpush.msra.mxu0 0.0
      %577 = vmatpush.msra.mxu0 0.0
      %578 = vmatpush.msra.mxu0 0.0
      %579 = vmatpush.msra.mxu0 0.0
      %580 = vmatpush.msra.mxu0 %v535
      %581 = vmatpush.msra.mxu0 %v534
      %582 = vmatmul.f32.gmra.mxu0 %v544
      %v583 = vpop.f32.mrf.mxu0
      %v584 = vadd.f32 %v564, %v583
      %585 = vdwg.mxu0
      %v586 = vadd.f32 %v515, %v584
      %v587 = vld [vmem:[%s2] sm:$0x1]
      %v589 = vperm.slane %v587, 0
      %v591 = vadd.f32 %v586, %v589
      %592 = vst [vmem:[%s298] sm:$0xff] %v591
      %v593 = vrot.slane %v591, 4
      %v594 = vadd.f32 %v591, %v593
      %v595 = vrot.slane %v594, 2
      %v596 = vadd.f32 %v594, %v595
      %v597 = vrot.slane %v596, 1
      %v598 = vadd.f32 %v596, %v597
      %v599 = vmul.f32 %v591, %v591
      %v600 = vrot.slane %v599, 4
      %v601 = vadd.f32 %v599, %v600
      %v602 = vrot.slane %v601, 2
      %v603 = vadd.f32 %v601, %v602
      %v604 = vrot.slane %v603, 1
      %v605 = vadd.f32 %v603, %v604
      %vm606 = vcmask 1040384
      %v607 = vsel %vm606, %v598, %v605
      %608 = vst [vmem:[%s306] sm:$0x3] %v607
      %p609 = scmp.lt.s32.totalorder %s22, 1
      %s610 = scalar_select %p609, %s22, 1
      %p611 = scmp.lt.s32.totalorder %s23, 1
      %s612 = scalar_select %p611, %s23, 1
      %s613 = smul.addr %s610, 2
      %s614 = sadd.s32 %s612, %s613
      %s615 = smul.addr %s614, 8
      %s616 = scalar_lea.vmem %s5, %s615
      %p617 = scmp.lt.s32.totalorder %s22, 1
      %s618 = scalar_select %p617, %s22, 1
      %p619 = scmp.lt.s32.totalorder %s23, 1
      %s620 = scalar_select %p619, %s23, 1
      %s621 = smul.addr %s618, 2
      %s622 = sadd.s32 %s620, %s621
      %s623 = smul.addr %s622, 2
      %s624 = scalar_lea.vmem %s6, %s623
      // Predicated region
      $region41: #{double_conv.4} parent=39 // pred_check
        %p625 = pneg %p162
      $region42: #{double_conv.4} parent=39 // pred_check_branch
        %627 = sbr.rel (%p625) target = $region44
      $region43: #{double_conv.4} parent=39 // pred_region
        _
      $region44: #{double_conv.4} parent=39 // pred_fallthru
        _
      // Predicated region
      $region45: #{double_conv.4} parent=39 // pred_check
        %p628 = pneg %p190
      $region46: #{double_conv.4} parent=39 // pred_check_branch
        %630 = sbr.rel (%p628) target = $region48
      $region47: #{double_conv.4} parent=39 // pred_region
        _
      $region48: #{double_conv.4} parent=39 // pred_fallthru
        _
    $region40: #{double_conv.4} parent=5 // pred_fallthru
      _
    %p631 = scmp.le.s32.totalorder 2, %s13
    // Predicated region
    $region49: #{double_conv.4} parent=5 // pred_check
      %p632 = pneg %p631
    $region50: #{double_conv.4} parent=5 // pred_check_branch
      %634 = sbr.rel (%p632) target = $region52
    $region51: #{double_conv.4} parent=5 // pred_region
      %s635 = ssub.s32 %s13, 2
      // Predicated region
      $region53: #{double_conv.4} parent=51 // pred_check
        %p636 = pneg %p168
      $region54: #{double_conv.4} parent=51 // pred_check_branch
        %638 = sbr.rel (%p636) target = $region56
      $region55: #{double_conv.4} parent=51 // pred_region
        %p639 = scmp.lt.s32.totalorder %s24, 1
        %s640 = scalar_select %p639, %s24, 1
        %p641 = scmp.lt.s32.totalorder %s25, 1
        %s642 = scalar_select %p641, %s25, 1
        %s643 = smul.addr %s640, 2
        %s644 = sadd.s32 %s642, %s643
        %s645 = smul.addr %s644, 8
        %s646 = scalar_lea.vmem %s5, %s645
      $region56: #{double_conv.4} parent=51 // pred_fallthru
        _
      // Predicated region
      $region57: #{double_conv.4} parent=51 // pred_check
        %p647 = pneg %p196
      $region58: #{double_conv.4} parent=51 // pred_check_branch
        %649 = sbr.rel (%p647) target = $region60
      $region59: #{double_conv.4} parent=51 // pred_region
        %p650 = scmp.lt.s32.totalorder %s24, 1
        %s651 = scalar_select %p650, %s24, 1
        %p652 = scmp.lt.s32.totalorder %s25, 1
        %s653 = scalar_select %p652, %s25, 1
        %s654 = smul.addr %s651, 2
        %s655 = sadd.s32 %s653, %s654
        %s656 = smul.addr %s655, 2
        %s657 = scalar_lea.vmem %s6, %s656
      $region60: #{double_conv.4} parent=51 // pred_fallthru
        _
    $region52: #{double_conv.4} parent=5 // pred_fallthru
      _
  $region6: #{double_conv.4} parent=0 // loop_footer
    %s17 = sadd.s32 1, %s13
  $region7: #{double_conv.4} parent=0 // loop_footer_branch
    %12 = sbr.rel target = $region3
  $region8: #{double_conv.4} parent=0 // loop_exit
    _

// kernel: double_conv.5
$region0: #{double_conv.5}
  #allocation0 [shape = 'u32[]', space=smem, size = 0x4, offset = 0x4, fixed_abs, tag = 'smem constant byte address 0x4 - core index']
  #allocation1 [shape = 'u32[72,128]{1,0:T(1,128)}', space=vmem, size = 0x9000, scoped, tag = 'internal scratch']
  %s0 = inlined_call_operand.vmem [shape: f32[2,16,128], index: 0, kind: input, shape index: {}]
  %s1 = inlined_call_operand.vmem [shape: f32[1,128], index: 1, kind: input, shape index: {}]
  %s2 = inlined_call_operand.vmem [shape: f32[1,128], index: 2, kind: input, shape index: {}]
  %s3 = inlined_call_operand.vmem [shape: f32[2,16,128], index: 3, kind: output, shape index: {}]
  %s4 = sld [smem:[#allocation0]]
  $region45: #{double_conv.5} parent=0
    _
  %s6 = ssub.s32 1, %s4
  %s7 = scalar_select 0, %s6, %s4
  loop: start=0, step=1, limit=6
  $region2: #{double_conv.5} parent=0 // loop_pre_header
    _
  $region3: #{double_conv.5} parent=0 // loop_header
    %s9 = sphi 0, %s13
    %p10 = scmp.ge.s32.totalorder %s9, 6
    %s16 = sphi 0, %s28
    %s17 = sphi 0, %s24
    %s18 = sphi 0, %s16
    %s19 = sphi 0, %s17
    %s20 = sphi 0, %s18
    %s21 = sphi 0, %s19
    %s33 = sphi 0, %s35
    %s36 = sphi 0, %s33
    %s37 = sphi 0, %s36
    %s53 = sphi 0, %s37
    %s57 = sphi 0, %s57
    %s59 = sphi 0, %s57
    %s60 = sphi 0, %s59
    %s74 = sphi 0, %s60
    %s78 = sphi 0, %s78
    %s80 = sphi 0, %s78
    %s81 = sphi 0, %s80
    %s95 = sphi 0, %s81
    %s103 = sphi 0, %s105
    %s106 = sphi 0, %s103
    %s107 = sphi 0, %s106
    %s123 = sphi 0, %s107
  $region4: #{double_conv.5} parent=0 // loop_header_branch
    %12 = sbr.rel (%p10) target = $region8
  $region5: #{double_conv.5} parent=0 // loop_body
    %s14 = ssub.s32 %s9, 1
    %s15 = ssub.s32 %s9, 2
    %s22 = sadd.s32 1, %s17
    %p23 = scmp.ge.s32.totalorder %s22, 2
    %s24 = scalar_select %p23, 0, %s22
    %s25 = sadd.s32 1, %s16
    %s26 = scalar_select %p23, %s25, %s16
    %p27 = scmp.ge.s32.totalorder %s26, 2
    %s28 = scalar_select %p27, 0, %s26
    %s29 = ssub.s32 %s16, %s28
    %s30 = ssub.s32 %s17, %s24
    %s31 = sor.u32 %s29, %s30
    %p32 = scmp.eq.s32.totalorder %s31, 0
    %s34 = sadd.s32 %s33, 1
    %s35 = scalar_select %p32, %s33, %s34
    %p38 = pneg %p32
    %p39 = scmp.eq.s32.totalorder %s9, 3
    %p40 = por %p38, %p39
    %p41 = scmp.ne.s32.totalorder %s33, %s36
    %p42 = scmp.eq.s32.totalorder %s9, 0
    %p43 = por %p41, %p42
    %p44 = scmp.ne.s32.totalorder %s33, %s36
    %p45 = scmp.eq.s32.totalorder %s14, 3
    %p46 = por %p44, %p45
    %p47 = scmp.ne.s32.totalorder %s36, %s37
    %p48 = scmp.eq.s32.totalorder %s14, 0
    %p49 = por %p47, %p48
    %p50 = scmp.ne.s32.totalorder %s36, %s37
    %p51 = scmp.eq.s32.totalorder %s15, 3
    %p52 = por %p50, %p51
    %p54 = scmp.ne.s32.totalorder %s37, %s53
    %p55 = scmp.eq.s32.totalorder %s15, 0
    %p56 = por %p54, %p55
    %s58 = sadd.s32 %s57, 1
    %p61 = scmp.eq.s32.totalorder %s9, 3
    %p62 = scmp.ne.s32.totalorder %s57, %s59
    %p63 = scmp.eq.s32.totalorder %s9, 0
    %p64 = por %p62, %p63
    %p65 = scmp.ne.s32.totalorder %s57, %s59
    %p66 = scmp.eq.s32.totalorder %s14, 3
    %p67 = por %p65, %p66
    %p68 = scmp.ne.s32.totalorder %s59, %s60
    %p69 = scmp.eq.s32.totalorder %s14, 0
    %p70 = por %p68, %p69
    %p71 = scmp.ne.s32.totalorder %s59, %s60
    %p72 = scmp.eq.s32.totalorder %s15, 3
    %p73 = por %p71, %p72
    %p75 = scmp.ne.s32.totalorder %s60, %s74
    %p76 = scmp.eq.s32.totalorder %s15, 0
    %p77 = por %p75, %p76
    %s79 = sadd.s32 %s78, 1
    %p82 = scmp.eq.s32.totalorder %s9, 3
    %p83 = scmp.ne.s32.totalorder %s78, %s80
    %p84 = scmp.eq.s32.totalorder %s9, 0
    %p85 = por %p83, %p84
    %p86 = scmp.ne.s32.totalorder %s78, %s80
    %p87 = scmp.eq.s32.totalorder %s14, 3
    %p88 = por %p86, %p87
    %p89 = scmp.ne.s32.totalorder %s80, %s81
    %p90 = scmp.eq.s32.totalorder %s14, 0
    %p91 = por %p89, %p90
    %p92 = scmp.ne.s32.totalorder %s80, %s81
    %p93 = scmp.eq.s32.totalorder %s15, 3
    %p94 = por %p92, %p93
    %p96 = scmp.ne.s32.totalorder %s81, %s95
    %p97 = scmp.eq.s32.totalorder %s15, 0
    %p98 = por %p96, %p97
    %s99 = ssub.s32 %s16, %s28
    %s100 = ssub.s32 %s17, %s24
    %s101 = sor.u32 %s99, %s100
    %p102 = scmp.eq.s32.totalorder %s101, 0
    %s104 = sadd.s32 %s103, 1
    %s105 = scalar_select %p102, %s103, %s104
    %p108 = pneg %p102
    %p109 = scmp.eq.s32.totalorder %s9, 3
    %p110 = por %p108, %p109
    %p111 = scmp.ne.s32.totalorder %s103, %s106
    %p112 = scmp.eq.s32.totalorder %s9, 0
    %p113 = por %p111, %p112
    %p114 = scmp.ne.s32.totalorder %s103, %s106
    %p115 = scmp.eq.s32.totalorder %s14, 3
    %p116 = por %p114, %p115
    %p117 = scmp.ne.s32.totalorder %s106, %s107
    %p118 = scmp.eq.s32.totalorder %s14, 0
    %p119 = por %p117, %p118
    %p120 = scmp.ne.s32.totalorder %s106, %s107
    %p121 = scmp.eq.s32.totalorder %s15, 3
    %p122 = por %p120, %p121
    %p124 = scmp.ne.s32.totalorder %s107, %s123
    %p125 = scmp.eq.s32.totalorder %s15, 0
    %p126 = por %p124, %p125
    %p127 = scmp.le.s32.totalorder 1, %s9
    %p128 = scmp.lt.s32.totalorder %s9, 5
    %p129 = pnand %p127, %p128
    %p130 = pneg %p129
    // Predicated region
    $region9: #{double_conv.5} parent=5 // pred_check
      _
    $region10: #{double_conv.5} parent=5 // pred_check_branch
      %132 = sbr.rel (%p129) target = $region12
    $region11: #{double_conv.5} parent=5 // pred_region
      %s133 = ssub.s32 %s9, 1
      // Predicated region
      $region13: #{double_conv.5} parent=11 // pred_check
        %p134 = pneg %p70
      $region14: #{double_conv.5} parent=11 // pred_check_branch
        %136 = sbr.rel (%p134) target = $region16
      $region15: #{double_conv.5} parent=11 // pred_region
        _
      $region16: #{double_conv.5} parent=11 // pred_fallthru
        _
      // Predicated region
      $region17: #{double_conv.5} parent=11 // pred_check
        %p137 = pneg %p91
      $region18: #{double_conv.5} parent=11 // pred_check_branch
        %139 = sbr.rel (%p137) target = $region20
      $region19: #{double_conv.5} parent=11 // pred_region
        _
      $region20: #{double_conv.5} parent=11 // pred_fallthru
        _
    $region12: #{double_conv.5} parent=5 // pred_fallthru
      _
    %p140 = scmp.lt.s32.totalorder %s9, 4
    // Predicated region
    $region21: #{double_conv.5} parent=5 // pred_check
      %p141 = pneg %p140
    $region22: #{double_conv.5} parent=5 // pred_check_branch
      %143 = sbr.rel (%p141) target = $region24
    $region23: #{double_conv.5} parent=5 // pred_region
      // Predicated region
      $region25: #{double_conv.5} parent=23 // pred_check
        %p144 = pneg %p43
      $region26: #{double_conv.5} parent=23 // pred_check_branch
        %146 = sbr.rel (%p144) target = $region28
      $region27: #{double_conv.5} parent=23 // pred_region
        %p147 = scmp.lt.s32.totalorder %s16, 1
        %s148 = scalar_select %p147, %s16, 1
        %p149 = scmp.lt.s32.totalorder %s17, 1
        %s150 = scalar_select %p149, %s17, 1
        %s151 = smul.addr %s148, 2
        %s152 = sadd.s32 %s150, %s151
        %s153 = smul.addr %s152, 8
        %s154 = scalar_lea.vmem %s0, %s153
      $region28: #{double_conv.5} parent=23 // pred_fallthru
        _
    $region24: #{double_conv.5} parent=5 // pred_fallthru
      _
    %p155 = scmp.le.s32.totalorder 1, %s9
    %p156 = scmp.lt.s32.totalorder %s9, 5
    %p157 = pnand %p155, %p156
    %p158 = pneg %p157
    // Predicated region
    $region29: #{double_conv.5} parent=5 // pred_check
      _
    $region30: #{double_conv.5} parent=5 // pred_check_branch
      %160 = sbr.rel (%p157) target = $region32
    $region31: #{double_conv.5} parent=5 // pred_region
      %s161 = ssub.s32 %s9, 1
      %p162 = scmp.lt.s32.totalorder %s18, 1
      %s163 = scalar_select %p162, %s18, 1
      %p164 = scmp.lt.s32.totalorder %s19, 1
      %s165 = scalar_select %p164, %s19, 1
      %s166 = smul.addr %s163, 2
      %s167 = sadd.s32 %s165, %s166
      %s168 = smul.addr %s167, 8
      %s169 = scalar_lea.vmem %s0, %s168
      %p170 = pneg %p49
      %p171 = pneg %p46
      %p172 = pneg %p70
      %p173 = pneg %p67
      %p174 = pneg %p91
      %p175 = pneg %p88
      %p176 = pneg %p119
      %p177 = pneg %p116
      %p178 = scmp.lt.s32.totalorder %s18, 1
      %s179 = scalar_select %p178, %s18, 1
      %p180 = scmp.lt.s32.totalorder %s19, 1
      %s181 = scalar_select %p180, %s19, 1
      %s182 = smul.addr %s179, 2
      %s183 = sadd.s32 %s181, %s182
      %s184 = smul.addr %s183, 8
      %s185 = scalar_lea.vmem %s3, %s184
      %p186 = scmp.lt.s32.totalorder %s18, 1
      %s187 = scalar_select %p186, %s18, 1
      %p188 = scmp.lt.s32.totalorder %s19, 1
      %s189 = scalar_select %p188, %s19, 1
      %s190 = smul.addr %s187, 2
      %s191 = sadd.s32 %s189, %s190
      %s192 = smul.addr %s191, 8
      %s193 = scalar_lea.vmem %s0, %s192
      %p194 = scmp.lt.s32.totalorder %s18, 1
      %s195 = scalar_select %p194, %s18, 1
      %p196 = scmp.lt.s32.totalorder %s19, 1
      %s197 = scalar_select %p196, %s19, 1
      %s198 = smul.addr %s195, 2
      %s199 = sadd.s32 %s197, %s198
      %s200 = smul.addr %s199, 8
      %s201 = scalar_lea.vmem %s3, %s200
      %v202 = vld [vmem:[%s193] sm:$0xff]
      %v203 = vld [vmem:[%s1] sm:$0x1]
      %v205 = vperm.slane %v203, 0
      %v207 = vmul.f32 %v202, %v205
      %v208 = vld [vmem:[%s2] sm:$0x1]
      %v210 = vperm.slane %v208, 0
      %v212 = vadd.f32 %v207, %v210
      %213 = vst [vmem:[%s201] sm:$0xff] %v212
      %p214 = scmp.lt.s32.totalorder %s18, 1
      %s215 = scalar_select %p214, %s18, 1
      %p216 = scmp.lt.s32.totalorder %s19, 1
      %s217 = scalar_select %p216, %s19, 1
      %s218 = smul.addr %s215, 2
      %s219 = sadd.s32 %s217, %s218
      %s220 = smul.addr %s219, 8
      %s221 = scalar_lea.vmem %s3, %s220
      // Predicated region
      $region33: #{double_conv.5} parent=31 // pred_check
        %p222 = pneg %p116
      $region34: #{double_conv.5} parent=31 // pred_check_branch
        %224 = sbr.rel (%p222) target = $region36
      $region35: #{double_conv.5} parent=31 // pred_region
        _
      $region36: #{double_conv.5} parent=31 // pred_fallthru
        _
    $region32: #{double_conv.5} parent=5 // pred_fallthru
      _
    %p225 = scmp.le.s32.totalorder 2, %s9
    // Predicated region
    $region37: #{double_conv.5} parent=5 // pred_check
      %p226 = pneg %p225
    $region38: #{double_conv.5} parent=5 // pred_check_branch
      %228 = sbr.rel (%p226) target = $region40
    $region39: #{double_conv.5} parent=5 // pred_region
      %s229 = ssub.s32 %s9, 2
      // Predicated region
      $region41: #{double_conv.5} parent=39 // pred_check
        %p230 = pneg %p122
      $region42: #{double_conv.5} parent=39 // pred_check_branch
        %232 = sbr.rel (%p230) target = $region44
      $region43: #{double_conv.5} parent=39 // pred_region
        %p233 = scmp.lt.s32.totalorder %s20, 1
        %s234 = scalar_select %p233, %s20, 1
        %p235 = scmp.lt.s32.totalorder %s21, 1
        %s236 = scalar_select %p235, %s21, 1
        %s237 = smul.addr %s234, 2
        %s238 = sadd.s32 %s236, %s237
        %s239 = smul.addr %s238, 8
        %s240 = scalar_lea.vmem %s3, %s239
      $region44: #{double_conv.5} parent=39 // pred_fallthru
        _
    $region40: #{double_conv.5} parent=5 // pred_fallthru
      _
  $region6: #{double_conv.5} parent=0 // loop_footer
    %s13 = sadd.s32 1, %s9
  $region7: #{double_conv.5} parent=0 // loop_footer_branch
    %8 = sbr.rel target = $region3
  $region8: #{double_conv.5} parent=0 // loop_exit
    _

</llo_original>
